<compile_context>
chip_gen: v5e
topology: v5e:2x2
jax: 0.10.0
libtpu: 0.0.40
codegen_flags: <defaults>
</compile_context>

<pallas_src>
import functools

import jax
import jax.numpy as jnp
import numpy as np
from jax.experimental import pallas as pl
from jax.experimental.pallas import tpu as pltpu


# ----------------------------- model config ---------------------------------
IN_FEATURES = 2
HIDDEN_FEATURES = 32
HIDDEN_LAYERS = 3          # 1 first SineLayer + (HIDDEN_LAYERS - 1) hidden SineLayers
OUT_FEATURES = 1
OUTERMOST_LINEAR = True
FIRST_OMEGA_0 = 30.0
HIDDEN_OMEGA_0 = 30.0

BATCH = 256                # small demo batch (multiple of 128 for lane density)
MAX_TILE_M = 4096          # batch-tile cap (VMEM use stays tiny, ~1.5 MB)


# ------------------------------ parameters ----------------------------------
def init_params(key):
    """SIREN init matching the PyTorch module.

    Returns a list of (W, b, omega) with W shaped (fan_out, fan_in) (PyTorch
    layout) and b shaped (fan_out, 1). omega is None for the final plain
    linear layer.
    """
    params = []

    def linear_init(key, fan_in, fan_out, w_bound):
        kw, kb = jax.random.split(key)
        w = jax.random.uniform(kw, (fan_out, fan_in), jnp.float32,
                               minval=-w_bound, maxval=w_bound)
        # PyTorch nn.Linear default bias init: U(-1/sqrt(fan_in), 1/sqrt(fan_in))
        b_bound = 1.0 / np.sqrt(fan_in)
        b = jax.random.uniform(kb, (fan_out, 1), jnp.float32,
                               minval=-b_bound, maxval=b_bound)
        return w, b

    keys = jax.random.split(key, HIDDEN_LAYERS + 1)

    # first sine layer
    w, b = linear_init(keys[0], IN_FEATURES, HIDDEN_FEATURES, 1.0 / IN_FEATURES)
    params.append((w, b, FIRST_OMEGA_0))

    # hidden sine layers
    hid_bound = np.sqrt(6.0 / HIDDEN_FEATURES) / HIDDEN_OMEGA_0
    for i in range(HIDDEN_LAYERS - 1):
        w, b = linear_init(keys[1 + i], HIDDEN_FEATURES, HIDDEN_FEATURES, hid_bound)
        params.append((w, b, HIDDEN_OMEGA_0))

    # outermost layer
    w, b = linear_init(keys[-1], HIDDEN_FEATURES, OUT_FEATURES, hid_bound)
    params.append((w, b, None if OUTERMOST_LINEAR else HIDDEN_OMEGA_0))
    return params


# ------------------------------- kernel --------------------------------------
def siren_kernel(*refs, layer_kinds):
    """Fused SIREN forward over one batch tile (batch on the lane axis).

    refs = (x_ref, w0, b0, w1, b1, ..., wL, bL, o_ref)
      x_ref : (IN, TILE_M)         o_ref : (OUT, TILE_M)
      w_l   : (fan_out, fan_in)    -- except "out_vpu" layers, passed (fan_in, 1)
      b_l   : (fan_out, 1)

    layer_kinds[l] = (kind, apply_sin) with kind in
      "first_vpu" : tiny-K contraction as broadcast multiply-adds (VPU)
      "mxu"       : jnp.dot on the MXU, f32 accumulate
      "out_vpu"   : fan_out==1 layer as broadcast mul + sublane reduce (XLU)
    omega is already folded into the sine layers' weights/bias.
    """
    x_ref = refs[0]
    o_ref = refs[-1]
    wb = refs[1:-1]

    h = x_ref[...]                                   # (IN, TILE_M), float32
    for l, (kind, apply_sin) in enumerate(layer_kinds):
        w = wb[2 * l][...]
        b = wb[2 * l + 1][...]
        if kind == "first_vpu":
            # K <= 8: keep the MXU free; broadcast MACs on the VPU.
            z = b                                    # (fan_out, 1) -> broadcasts over lanes
            for k in range(w.shape[1]):
                z = z + w[:, k:k + 1] * h[k:k + 1, :]
        elif kind == "out_vpu":
            # fan_out == 1: w is (fan_in, 1); broadcast multiply then a
            # sublane reduction (XLU slot, otherwise idle) -> no MXU
            # stationary swap for a nearly-empty matmul.
            z = jnp.sum(w * h, axis=0, keepdims=True) + b
        else:
            # Hidden 32x32 layers on the MXU.
            z = jnp.dot(w, h, preferred_element_type=jnp.float32) + b
        h = jnp.sin(z) if apply_sin else z           # bias-add + sin fused per layer
    o_ref[...] = h.astype(o_ref.dtype)


# ------------------------------- wrapper --------------------------------------
def _choose_tile(n_align, max_tile):
    """Pick a 128-aligned batch tile.

    Policy (per review): never shrink the tile to make it divide N (that can
    collapse to 128-wide tiles, ~3x off roofline); instead the caller pads N
    up to a multiple of the tile.  Guarantee >= 2 grid steps whenever there
    are >= 256 rows so v7x can shard the parallel axis across both
    TensorCores.
    """
    if n_align < 256:
        return n_align                               # a single 128-row tile
    half = ((n_align // 2 + 127) // 128) * 128       # exactly-2-step tile, 128-aligned
    return min(max_tile, half)


def siren_forward(x, params, max_tile=MAX_TILE_M):
    """Run the fused SIREN kernel on x of shape (N, in_features)."""
    n, in_features = x.shape
    out_features = params[-1][0].shape[0]

    # --- batch tiling: lane-align, then pad up to a multiple of the tile ----
    n_align = ((n + 127) // 128) * 128
    tile_m = _choose_tile(n_align, max_tile)
    n_pad = ((n_align + tile_m - 1) // tile_m) * tile_m
    grid = (n_pad // tile_m,)

    # Batch on the lane axis: kernel operates on (features, batch).
    xt = x.astype(jnp.float32).T                     # (IN, N)
    if n_pad != n:
        xt = jnp.pad(xt, ((0, 0), (0, n_pad - n)))

    # --- fold omega into sine-layer params; classify each layer ------------
    layer_kinds = []
    flat_wb = []
    in_specs = [pl.BlockSpec((in_features, tile_m), lambda i: (0, i))]
    for li, (w, b, omega) in enumerate(params):
        fan_out, fan_in = w.shape
        if omega is not None:                        # sin(omega*(Wh+b)) == sin(W'h+b')
            w = w * omega
            b = b * omega
        if li == 0 and fan_in <= 8:
            kind = "first_vpu"
        elif fan_out == 1:
            kind = "out_vpu"
            w = w.T                                  # (fan_in, 1): broadcast-ready column
        else:
            kind = "mxu"
        layer_kinds.append((kind, omega is not None))
        flat_wb.extend([w, b])
        # Full-array blocks with constant index maps: weights stay resident
        # in VMEM across grid steps (no re-streaming of constant blocks).
        in_specs.append(pl.BlockSpec(w.shape, lambda i: (0, 0)))
        in_specs.append(pl.BlockSpec(b.shape, lambda i: (0, 0)))

    out_spec = pl.BlockSpec((out_features, tile_m), lambda i: (0, i))

    # Advisory cost estimate so XLA schedules around this small custom call.
    flops = 0
    transcendentals = 0
    bytes_accessed = in_features * n_pad * 4 + out_features * n_pad * 4
    for w, b, omega in params:
        fo, fi = w.shape
        flops += (2 * fi + 1) * fo * n_pad
        if omega is not None:
            transcendentals += fo * n_pad
        bytes_accessed += (w.size + b.size) * 4
    cost = pl.CostEstimate(flops=int(flops),
                           transcendentals=int(transcendentals),
                           bytes_accessed=int(bytes_accessed))

    kernel = functools.partial(siren_kernel, layer_kinds=tuple(layer_kinds))

    out_t = pl.pallas_call(
        kernel,
        out_shape=jax.ShapeDtypeStruct((out_features, n_pad), jnp.float32),
        grid_spec=pltpu.PrefetchScalarGridSpec(
            num_scalar_prefetch=0,
            grid=grid,
            in_specs=in_specs,
            out_specs=out_spec,
        ),
        compiler_params=pltpu.CompilerParams(
            dimension_semantics=("parallel",)),
        cost_estimate=cost,
    )(xt, *flat_wb)

    return out_t.T[:n]                               # back to (N, out_features)


# ------------------------------ reference ------------------------------------
def siren_reference(x, params):
    """Pure-numpy float64 reference matching the PyTorch module semantics."""
    h = np.asarray(x, dtype=np.float64)
    for w, b, omega in params:
        wn = np.asarray(w, dtype=np.float64)         # (out, in)
        bn = np.asarray(b, dtype=np.float64)[:, 0]   # (out,)
        z = h @ wn.T + bn
        h = z if omega is None else np.sin(omega * z)
    return h


# -------------------------------- main ---------------------------------------
if __name__ == "__main__":
    key = jax.random.PRNGKey(0)
    kx, kp = jax.random.split(key)

    params = init_params(kp)
    x = jax.random.uniform(kx, (BATCH, IN_FEATURES), jnp.float32,
                           minval=-1.0, maxval=1.0)

    out = siren_forward(x, params)
    out = jax.block_until_ready(out)

    ref = siren_reference(x, params)
    np.testing.assert_allclose(np.asarray(out, dtype=np.float64), ref,
                               rtol=1e-3, atol=5e-4)

    print("KERNEL_OK")
</pallas_src>

<mosaic_0001>
module attributes {stable_mosaic.version = 11 : i64} {
  func.func @siren_kernel(%arg0: i32, %arg1: memref<2x128xf32, #tpu.memory_space<vmem>>, %arg2: memref<32x2xf32, #tpu.memory_space<vmem>>, %arg3: memref<32x1xf32, #tpu.memory_space<vmem>>, %arg4: memref<32x32xf32, #tpu.memory_space<vmem>>, %arg5: memref<32x1xf32, #tpu.memory_space<vmem>>, %arg6: memref<32x32xf32, #tpu.memory_space<vmem>>, %arg7: memref<32x1xf32, #tpu.memory_space<vmem>>, %arg8: memref<32x1xf32, #tpu.memory_space<vmem>>, %arg9: memref<1x1xf32, #tpu.memory_space<vmem>>, %arg10: memref<1x128xf32, #tpu.memory_space<vmem>>) attributes {dimension_semantics = [#tpu.dimension_semantics<parallel>], iteration_bounds = array<i64: 2>, scalar_prefetch = 0 : i64, scratch_operands = 0 : i64, tpu.core_type = #tpu.core_type<tc>, window_params = [{transform_indices = @transform_0, window_bounds = array<i64: 2, 128>}, {pipeline_mode = #tpu.pipeline_mode<synchronous>, transform_indices = @transform_1, window_bounds = array<i64: 32, 2>}, {pipeline_mode = #tpu.pipeline_mode<synchronous>, transform_indices = @transform_2, window_bounds = array<i64: 32, 1>}, {pipeline_mode = #tpu.pipeline_mode<synchronous>, transform_indices = @transform_3, window_bounds = array<i64: 32, 32>}, {pipeline_mode = #tpu.pipeline_mode<synchronous>, transform_indices = @transform_4, window_bounds = array<i64: 32, 1>}, {pipeline_mode = #tpu.pipeline_mode<synchronous>, transform_indices = @transform_5, window_bounds = array<i64: 32, 32>}, {pipeline_mode = #tpu.pipeline_mode<synchronous>, transform_indices = @transform_6, window_bounds = array<i64: 32, 1>}, {pipeline_mode = #tpu.pipeline_mode<synchronous>, transform_indices = @transform_7, window_bounds = array<i64: 32, 1>}, {pipeline_mode = #tpu.pipeline_mode<synchronous>, transform_indices = @transform_8, window_bounds = array<i64: 1, 1>}, {transform_indices = @transform_9, window_bounds = array<i64: 1, 128>}]} {
    %c0 = arith.constant 0 : index
    %c0_0 = arith.constant 0 : index
    %0 = vector.load %arg1[%c0, %c0_0] : memref<2x128xf32, #tpu.memory_space<vmem>>, vector<2x128xf32>
    %c0_1 = arith.constant 0 : index
    %c0_2 = arith.constant 0 : index
    %1 = vector.load %arg2[%c0_1, %c0_2] : memref<32x2xf32, #tpu.memory_space<vmem>>, vector<32x2xf32>
    %c0_3 = arith.constant 0 : index
    %c0_4 = arith.constant 0 : index
    %2 = vector.load %arg3[%c0_3, %c0_4] : memref<32x1xf32, #tpu.memory_space<vmem>>, vector<32x1xf32>
    %3 = vector.extract_strided_slice %1 {offsets = [0, 0], sizes = [32, 1], strides = [1, 1]} : vector<32x2xf32> to vector<32x1xf32>
    %4 = vector.extract_strided_slice %0 {offsets = [0, 0], sizes = [1, 128], strides = [1, 1]} : vector<2x128xf32> to vector<1x128xf32>
    %5 = vector.broadcast %3 : vector<32x1xf32> to vector<32x128xf32>
    %6 = vector.broadcast %4 : vector<1x128xf32> to vector<32x128xf32>
    %7 = arith.mulf %5, %6 : vector<32x128xf32>
    %8 = vector.broadcast %2 : vector<32x1xf32> to vector<32x128xf32>
    %9 = arith.addf %8, %7 : vector<32x128xf32>
    %10 = vector.extract_strided_slice %1 {offsets = [0, 1], sizes = [32, 1], strides = [1, 1]} : vector<32x2xf32> to vector<32x1xf32>
    %11 = vector.extract_strided_slice %0 {offsets = [1, 0], sizes = [1, 128], strides = [1, 1]} : vector<2x128xf32> to vector<1x128xf32>
    %12 = vector.broadcast %10 : vector<32x1xf32> to vector<32x128xf32>
    %13 = vector.broadcast %11 : vector<1x128xf32> to vector<32x128xf32>
    %14 = arith.mulf %12, %13 : vector<32x128xf32>
    %15 = arith.addf %9, %14 : vector<32x128xf32>
    %16 = math.sin %15 : vector<32x128xf32>
    %c0_5 = arith.constant 0 : index
    %c0_6 = arith.constant 0 : index
    %17 = vector.load %arg4[%c0_5, %c0_6] : memref<32x32xf32, #tpu.memory_space<vmem>>, vector<32x32xf32>
    %c0_7 = arith.constant 0 : index
    %c0_8 = arith.constant 0 : index
    %18 = vector.load %arg5[%c0_7, %c0_8] : memref<32x1xf32, #tpu.memory_space<vmem>>, vector<32x1xf32>
    %cst = arith.constant dense<0.000000e+00> : vector<32x128xf32>
    %19 = tpu.matmul %17, %16, %cst {dimension_numbers = #tpu.dot_dimension_numbers<[1], [0], [0], [1], [0, 0, 1, 1], [], []>} : vector<32x32xf32>, vector<32x128xf32>, vector<32x128xf32> -> vector<32x128xf32>
    %20 = vector.broadcast %18 : vector<32x1xf32> to vector<32x128xf32>
    %21 = arith.addf %19, %20 : vector<32x128xf32>
    %22 = math.sin %21 : vector<32x128xf32>
    %c0_9 = arith.constant 0 : index
    %c0_10 = arith.constant 0 : index
    %23 = vector.load %arg6[%c0_9, %c0_10] : memref<32x32xf32, #tpu.memory_space<vmem>>, vector<32x32xf32>
    %c0_11 = arith.constant 0 : index
    %c0_12 = arith.constant 0 : index
    %24 = vector.load %arg7[%c0_11, %c0_12] : memref<32x1xf32, #tpu.memory_space<vmem>>, vector<32x1xf32>
    %cst_13 = arith.constant dense<0.000000e+00> : vector<32x128xf32>
    %25 = tpu.matmul %23, %22, %cst_13 {dimension_numbers = #tpu.dot_dimension_numbers<[1], [0], [0], [1], [0, 0, 1, 1], [], []>} : vector<32x32xf32>, vector<32x128xf32>, vector<32x128xf32> -> vector<32x128xf32>
    %26 = vector.broadcast %24 : vector<32x1xf32> to vector<32x128xf32>
    %27 = arith.addf %25, %26 : vector<32x128xf32>
    %28 = math.sin %27 : vector<32x128xf32>
    %c0_14 = arith.constant 0 : index
    %c0_15 = arith.constant 0 : index
    %29 = vector.load %arg8[%c0_14, %c0_15] : memref<32x1xf32, #tpu.memory_space<vmem>>, vector<32x1xf32>
    %c0_16 = arith.constant 0 : index
    %c0_17 = arith.constant 0 : index
    %30 = vector.load %arg9[%c0_16, %c0_17] : memref<1x1xf32, #tpu.memory_space<vmem>>, vector<1x1xf32>
    %31 = vector.broadcast %29 : vector<32x1xf32> to vector<32x128xf32>
    %32 = arith.mulf %31, %28 : vector<32x128xf32>
    %cst_18 = arith.constant dense<0.000000e+00> : vector<128xf32>
    %33 = vector.multi_reduction <add>, %32, %cst_18 [0] : vector<32x128xf32> to vector<128xf32>
    %34 = vector.shape_cast %33 : vector<128xf32> to vector<1x128xf32>
    %35 = vector.broadcast %30 : vector<1x1xf32> to vector<1x128xf32>
    %36 = arith.addf %34, %35 : vector<1x128xf32>
    %c0_19 = arith.constant 0 : index
    %c0_20 = arith.constant 0 : index
    %37 = vector.load %arg10[%c0_19, %c0_20] : memref<1x128xf32, #tpu.memory_space<vmem>>, vector<1x128xf32>
    tpu.vector_store %arg10[%c0_19, %c0_20], %36 {strides = array<i32>} : memref<1x128xf32, #tpu.memory_space<vmem>>, vector<1x128xf32>,
    return
  }
  func.func @transform_0(%arg0: i32) -> (i32, i32) {
    %c0_i32 = arith.constant 0 : i32
    %c0_i32_0 = arith.constant 0 : i32
    return %c0_i32, %arg0 : i32, i32
  }
  func.func @transform_1(%arg0: i32) -> (i32, i32) {
    %c0_i32 = arith.constant 0 : i32
    %c0_i32_0 = arith.constant 0 : i32
    %c0_i32_1 = arith.constant 0 : i32
    return %c0_i32, %c0_i32_0 : i32, i32
  }
  func.func @transform_2(%arg0: i32) -> (i32, i32) {
    %c0_i32 = arith.constant 0 : i32
    %c0_i32_0 = arith.constant 0 : i32
    %c0_i32_1 = arith.constant 0 : i32
    return %c0_i32, %c0_i32_0 : i32, i32
  }
  func.func @transform_3(%arg0: i32) -> (i32, i32) {
    %c0_i32 = arith.constant 0 : i32
    %c0_i32_0 = arith.constant 0 : i32
    %c0_i32_1 = arith.constant 0 : i32
    return %c0_i32, %c0_i32_0 : i32, i32
  }
  func.func @transform_4(%arg0: i32) -> (i32, i32) {
    %c0_i32 = arith.constant 0 : i32
    %c0_i32_0 = arith.constant 0 : i32
    %c0_i32_1 = arith.constant 0 : i32
    return %c0_i32, %c0_i32_0 : i32, i32
  }
  func.func @transform_5(%arg0: i32) -> (i32, i32) {
    %c0_i32 = arith.constant 0 : i32
    %c0_i32_0 = arith.constant 0 : i32
    %c0_i32_1 = arith.constant 0 : i32
    return %c0_i32, %c0_i32_0 : i32, i32
  }
  func.func @transform_6(%arg0: i32) -> (i32, i32) {
    %c0_i32 = arith.constant 0 : i32
    %c0_i32_0 = arith.constant 0 : i32
    %c0_i32_1 = arith.constant 0 : i32
    return %c0_i32, %c0_i32_0 : i32, i32
  }
  func.func @transform_7(%arg0: i32) -> (i32, i32) {
    %c0_i32 = arith.constant 0 : i32
    %c0_i32_0 = arith.constant 0 : i32
    %c0_i32_1 = arith.constant 0 : i32
    return %c0_i32, %c0_i32_0 : i32, i32
  }
  func.func @transform_8(%arg0: i32) -> (i32, i32) {
    %c0_i32 = arith.constant 0 : i32
    %c0_i32_0 = arith.constant 0 : i32
    %c0_i32_1 = arith.constant 0 : i32
    return %c0_i32, %c0_i32_0 : i32, i32
  }
  func.func @transform_9(%arg0: i32) -> (i32, i32) {
    %c0_i32 = arith.constant 0 : i32
    %c0_i32_0 = arith.constant 0 : i32
    return %c0_i32, %arg0 : i32, i32
  }
}

</mosaic_0001>

<llo_original>
// kernel: tpu_custom_call.1
$region0: #{tpu_custom_call.1}
  #allocation0 [shape = 'u32[]', space=smem, size = 0x4, offset = 0x4, fixed_abs, tag = 'smem constant byte address 0x4 - core index']
  #allocation1 [shape = 'u32[72,128]{1,0:T(1,128)}', space=vmem, size = 0x9000, scoped, tag = 'internal scratch']
  #allocation2 [shape = 'f32[1,1]{1,0:T(1,128)S(1)}', space=vmem, size = 0x200, scoped, tag = 'scoped memory for tpu_custom_call.1']
  %s0 = inlined_call_operand.vmem [shape: f32[2,256], index: 0, kind: input, shape index: {}]
  %s1 = inlined_call_operand.vmem [shape: f32[32,2], index: 1, kind: input, shape index: {}]
  %s2 = inlined_call_operand.vmem [shape: f32[32,1], index: 2, kind: input, shape index: {}]
  %s3 = inlined_call_operand.vmem [shape: f32[32,32], index: 3, kind: input, shape index: {}]
  %s4 = inlined_call_operand.vmem [shape: f32[32,1], index: 4, kind: input, shape index: {}]
  %s5 = inlined_call_operand.vmem [shape: f32[32,32], index: 5, kind: input, shape index: {}]
  %s6 = inlined_call_operand.vmem [shape: f32[32,1], index: 6, kind: input, shape index: {}]
  %s7 = inlined_call_operand.vmem [shape: f32[32,1], index: 7, kind: input, shape index: {}]
  %s8 = inlined_call_operand.<no memory space> [shape: f32[1,1], index: 8, kind: input, shape index: {}]
  %s9 = inlined_call_operand.hbm [shape: f32[1,256], index: 9, kind: output, shape index: {}]
  %s10 = sld [smem:[#allocation0]]
  $region69: #{tpu_custom_call.1} parent=0
    _
  %s12 = ssub.s32 1, %s10
  %s13 = scalar_select 0, %s12, %s10
  %v14 = vstv %s8
  %15 = vst [vmem:[#allocation2] sm:$0x1] %v14
  $region1: #{tpu_custom_call.1} parent=0
    #allocation3 [shape = 'u8[1024]{0}', space=vmem, size = 0x400, scoped, tag = 'output window, operand 0']
    #allocation4 [shape = 's32[2]{0}', space=sflag, size = 0x8, scoped, tag = 'scoped memory for tpu_custom_call.1']
    %16 = vsyncpa [#allocation4], 0
    %s17 = scalar_lea.sflag [#allocation4], 1
    %18 = vsyncpa %s17, 0
    loop: start=0, step=1, limit=4
    $region2: #{tpu_custom_call.1} parent=1 // loop_pre_header
      _
    $region3: #{tpu_custom_call.1} parent=1 // loop_header
      %s20 = sphi 0, %s24
      %p21 = scmp.ge.s32.totalorder %s20, 4
      %s30 = sphi 0, %s32
      %s33 = sphi 0, %s30
      %s34 = sphi 0, %s33
      %s50 = sphi 0, %s34
      %s54 = sphi 0, %s54
      %s56 = sphi 0, %s54
      %s57 = sphi 0, %s56
      %s71 = sphi 0, %s57
      %s75 = sphi 0, %s75
      %s77 = sphi 0, %s75
      %s78 = sphi 0, %s77
      %s92 = sphi 0, %s78
      %s96 = sphi 0, %s96
      %s98 = sphi 0, %s96
      %s99 = sphi 0, %s98
      %s113 = sphi 0, %s99
      %s117 = sphi 0, %s117
      %s119 = sphi 0, %s117
      %s120 = sphi 0, %s119
      %s134 = sphi 0, %s120
      %s138 = sphi 0, %s138
      %s140 = sphi 0, %s138
      %s141 = sphi 0, %s140
      %s155 = sphi 0, %s141
      %s159 = sphi 0, %s159
      %s161 = sphi 0, %s159
      %s162 = sphi 0, %s161
      %s176 = sphi 0, %s162
      %s180 = sphi 0, %s180
      %s182 = sphi 0, %s180
      %s183 = sphi 0, %s182
      %s197 = sphi 0, %s183
      %s201 = sphi 0, %s201
      %s203 = sphi 0, %s201
      %s204 = sphi 0, %s203
      %s218 = sphi 0, %s204
      %s224 = sphi 0, %s226
      %s227 = sphi 0, %s224
      %s228 = sphi 0, %s227
      %s244 = sphi 0, %s228
    $region4: #{tpu_custom_call.1} parent=1 // loop_header_branch
      %23 = sbr.rel (%p21) target = $region8
    $region5: #{tpu_custom_call.1} parent=1 // loop_body
      %s25 = ssub.s32 %s20, 1
      %s26 = ssub.s32 %s20, 2
      %s27 = sadd.s32 %s20, 1
      %s28 = ssub.s32 %s20, %s27
      %p29 = scmp.eq.s32.totalorder %s28, 0
      %s31 = sadd.s32 %s30, 1
      %s32 = scalar_select %p29, %s30, %s31
      %p35 = pneg %p29
      %p36 = scmp.eq.s32.totalorder %s20, 1
      %p37 = por %p35, %p36
      %p38 = scmp.ne.s32.totalorder %s30, %s33
      %p39 = scmp.eq.s32.totalorder %s20, 0
      %p40 = por %p38, %p39
      %p41 = scmp.ne.s32.totalorder %s30, %s33
      %p42 = scmp.eq.s32.totalorder %s25, 1
      %p43 = por %p41, %p42
      %p44 = scmp.ne.s32.totalorder %s33, %s34
      %p45 = scmp.eq.s32.totalorder %s25, 0
      %p46 = por %p44, %p45
      %p47 = scmp.ne.s32.totalorder %s33, %s34
      %p48 = scmp.eq.s32.totalorder %s26, 1
      %p49 = por %p47, %p48
      %p51 = scmp.ne.s32.totalorder %s34, %s50
      %p52 = scmp.eq.s32.totalorder %s26, 0
      %p53 = por %p51, %p52
      %s55 = sadd.s32 %s54, 1
      %p58 = scmp.eq.s32.totalorder %s20, 1
      %p59 = scmp.ne.s32.totalorder %s54, %s56
      %p60 = scmp.eq.s32.totalorder %s20, 0
      %p61 = por %p59, %p60
      %p62 = scmp.ne.s32.totalorder %s54, %s56
      %p63 = scmp.eq.s32.totalorder %s25, 1
      %p64 = por %p62, %p63
      %p65 = scmp.ne.s32.totalorder %s56, %s57
      %p66 = scmp.eq.s32.totalorder %s25, 0
      %p67 = por %p65, %p66
      %p68 = scmp.ne.s32.totalorder %s56, %s57
      %p69 = scmp.eq.s32.totalorder %s26, 1
      %p70 = por %p68, %p69
      %p72 = scmp.ne.s32.totalorder %s57, %s71
      %p73 = scmp.eq.s32.totalorder %s26, 0
      %p74 = por %p72, %p73
      %s76 = sadd.s32 %s75, 1
      %p79 = scmp.eq.s32.totalorder %s20, 1
      %p80 = scmp.ne.s32.totalorder %s75, %s77
      %p81 = scmp.eq.s32.totalorder %s20, 0
      %p82 = por %p80, %p81
      %p83 = scmp.ne.s32.totalorder %s75, %s77
      %p84 = scmp.eq.s32.totalorder %s25, 1
      %p85 = por %p83, %p84
      %p86 = scmp.ne.s32.totalorder %s77, %s78
      %p87 = scmp.eq.s32.totalorder %s25, 0
      %p88 = por %p86, %p87
      %p89 = scmp.ne.s32.totalorder %s77, %s78
      %p90 = scmp.eq.s32.totalorder %s26, 1
      %p91 = por %p89, %p90
      %p93 = scmp.ne.s32.totalorder %s78, %s92
      %p94 = scmp.eq.s32.totalorder %s26, 0
      %p95 = por %p93, %p94
      %s97 = sadd.s32 %s96, 1
      %p100 = scmp.eq.s32.totalorder %s20, 1
      %p101 = scmp.ne.s32.totalorder %s96, %s98
      %p102 = scmp.eq.s32.totalorder %s20, 0
      %p103 = por %p101, %p102
      %p104 = scmp.ne.s32.totalorder %s96, %s98
      %p105 = scmp.eq.s32.totalorder %s25, 1
      %p106 = por %p104, %p105
      %p107 = scmp.ne.s32.totalorder %s98, %s99
      %p108 = scmp.eq.s32.totalorder %s25, 0
      %p109 = por %p107, %p108
      %p110 = scmp.ne.s32.totalorder %s98, %s99
      %p111 = scmp.eq.s32.totalorder %s26, 1
      %p112 = por %p110, %p111
      %p114 = scmp.ne.s32.totalorder %s99, %s113
      %p115 = scmp.eq.s32.totalorder %s26, 0
      %p116 = por %p114, %p115
      %s118 = sadd.s32 %s117, 1
      %p121 = scmp.eq.s32.totalorder %s20, 1
      %p122 = scmp.ne.s32.totalorder %s117, %s119
      %p123 = scmp.eq.s32.totalorder %s20, 0
      %p124 = por %p122, %p123
      %p125 = scmp.ne.s32.totalorder %s117, %s119
      %p126 = scmp.eq.s32.totalorder %s25, 1
      %p127 = por %p125, %p126
      %p128 = scmp.ne.s32.totalorder %s119, %s120
      %p129 = scmp.eq.s32.totalorder %s25, 0
      %p130 = por %p128, %p129
      %p131 = scmp.ne.s32.totalorder %s119, %s120
      %p132 = scmp.eq.s32.totalorder %s26, 1
      %p133 = por %p131, %p132
      %p135 = scmp.ne.s32.totalorder %s120, %s134
      %p136 = scmp.eq.s32.totalorder %s26, 0
      %p137 = por %p135, %p136
      %s139 = sadd.s32 %s138, 1
      %p142 = scmp.eq.s32.totalorder %s20, 1
      %p143 = scmp.ne.s32.totalorder %s138, %s140
      %p144 = scmp.eq.s32.totalorder %s20, 0
      %p145 = por %p143, %p144
      %p146 = scmp.ne.s32.totalorder %s138, %s140
      %p147 = scmp.eq.s32.totalorder %s25, 1
      %p148 = por %p146, %p147
      %p149 = scmp.ne.s32.totalorder %s140, %s141
      %p150 = scmp.eq.s32.totalorder %s25, 0
      %p151 = por %p149, %p150
      %p152 = scmp.ne.s32.totalorder %s140, %s141
      %p153 = scmp.eq.s32.totalorder %s26, 1
      %p154 = por %p152, %p153
      %p156 = scmp.ne.s32.totalorder %s141, %s155
      %p157 = scmp.eq.s32.totalorder %s26, 0
      %p158 = por %p156, %p157
      %s160 = sadd.s32 %s159, 1
      %p163 = scmp.eq.s32.totalorder %s20, 1
      %p164 = scmp.ne.s32.totalorder %s159, %s161
      %p165 = scmp.eq.s32.totalorder %s20, 0
      %p166 = por %p164, %p165
      %p167 = scmp.ne.s32.totalorder %s159, %s161
      %p168 = scmp.eq.s32.totalorder %s25, 1
      %p169 = por %p167, %p168
      %p170 = scmp.ne.s32.totalorder %s161, %s162
      %p171 = scmp.eq.s32.totalorder %s25, 0
      %p172 = por %p170, %p171
      %p173 = scmp.ne.s32.totalorder %s161, %s162
      %p174 = scmp.eq.s32.totalorder %s26, 1
      %p175 = por %p173, %p174
      %p177 = scmp.ne.s32.totalorder %s162, %s176
      %p178 = scmp.eq.s32.totalorder %s26, 0
      %p179 = por %p177, %p178
      %s181 = sadd.s32 %s180, 1
      %p184 = scmp.eq.s32.totalorder %s20, 1
      %p185 = scmp.ne.s32.totalorder %s180, %s182
      %p186 = scmp.eq.s32.totalorder %s20, 0
      %p187 = por %p185, %p186
      %p188 = scmp.ne.s32.totalorder %s180, %s182
      %p189 = scmp.eq.s32.totalorder %s25, 1
      %p190 = por %p188, %p189
      %p191 = scmp.ne.s32.totalorder %s182, %s183
      %p192 = scmp.eq.s32.totalorder %s25, 0
      %p193 = por %p191, %p192
      %p194 = scmp.ne.s32.totalorder %s182, %s183
      %p195 = scmp.eq.s32.totalorder %s26, 1
      %p196 = por %p194, %p195
      %p198 = scmp.ne.s32.totalorder %s183, %s197
      %p199 = scmp.eq.s32.totalorder %s26, 0
      %p200 = por %p198, %p199
      %s202 = sadd.s32 %s201, 1
      %p205 = scmp.eq.s32.totalorder %s20, 1
      %p206 = scmp.ne.s32.totalorder %s201, %s203
      %p207 = scmp.eq.s32.totalorder %s20, 0
      %p208 = por %p206, %p207
      %p209 = scmp.ne.s32.totalorder %s201, %s203
      %p210 = scmp.eq.s32.totalorder %s25, 1
      %p211 = por %p209, %p210
      %p212 = scmp.ne.s32.totalorder %s203, %s204
      %p213 = scmp.eq.s32.totalorder %s25, 0
      %p214 = por %p212, %p213
      %p215 = scmp.ne.s32.totalorder %s203, %s204
      %p216 = scmp.eq.s32.totalorder %s26, 1
      %p217 = por %p215, %p216
      %p219 = scmp.ne.s32.totalorder %s204, %s218
      %p220 = scmp.eq.s32.totalorder %s26, 0
      %p221 = por %p219, %p220
      %s222 = ssub.s32 %s20, %s27
      %p223 = scmp.eq.s32.totalorder %s222, 0
      %s225 = sadd.s32 %s224, 1
      %s226 = scalar_select %p223, %s224, %s225
      %p229 = pneg %p223
      %p230 = scmp.eq.s32.totalorder %s20, 1
      %p231 = por %p229, %p230
      %p232 = scmp.ne.s32.totalorder %s224, %s227
      %p233 = scmp.eq.s32.totalorder %s20, 0
      %p234 = por %p232, %p233
      %p235 = scmp.ne.s32.totalorder %s224, %s227
      %p236 = scmp.eq.s32.totalorder %s25, 1
      %p237 = por %p235, %p236
      %p238 = scmp.ne.s32.totalorder %s227, %s228
      %p239 = scmp.eq.s32.totalorder %s25, 0
      %p240 = por %p238, %p239
      %p241 = scmp.ne.s32.totalorder %s227, %s228
      %p242 = scmp.eq.s32.totalorder %s26, 1
      %p243 = por %p241, %p242
      %p245 = scmp.ne.s32.totalorder %s228, %s244
      %p246 = scmp.eq.s32.totalorder %s26, 0
      %p247 = por %p245, %p246
      %p248 = scmp.le.s32.totalorder 1, %s20
      %p249 = scmp.lt.s32.totalorder %s20, 3
      %p250 = pnand %p248, %p249
      %p251 = pneg %p250
      // Predicated region
      $region9: #{tpu_custom_call.1} parent=5 // pred_check
        _
      $region10: #{tpu_custom_call.1} parent=5 // pred_check_branch
        %253 = sbr.rel (%p250) target = $region12
      $region11: #{tpu_custom_call.1} parent=5 // pred_region
        %s254 = ssub.s32 %s20, 1
        // Predicated region
        $region13: #{tpu_custom_call.1} parent=11 // pred_check
          %p255 = pneg %p67
        $region14: #{tpu_custom_call.1} parent=11 // pred_check_branch
          %257 = sbr.rel (%p255) target = $region16
        $region15: #{tpu_custom_call.1} parent=11 // pred_region
          _
        $region16: #{tpu_custom_call.1} parent=11 // pred_fallthru
          _
        // Predicated region
        $region17: #{tpu_custom_call.1} parent=11 // pred_check
          %p258 = pneg %p88
        $region18: #{tpu_custom_call.1} parent=11 // pred_check_branch
          %260 = sbr.rel (%p258) target = $region20
        $region19: #{tpu_custom_call.1} parent=11 // pred_region
          _
        $region20: #{tpu_custom_call.1} parent=11 // pred_fallthru
          _
        // Predicated region
        $region21: #{tpu_custom_call.1} parent=11 // pred_check
          %p261 = pneg %p109
        $region22: #{tpu_custom_call.1} parent=11 // pred_check_branch
          %263 = sbr.rel (%p261) target = $region24
        $region23: #{tpu_custom_call.1} parent=11 // pred_region
          _
        $region24: #{tpu_custom_call.1} parent=11 // pred_fallthru
          _
        // Predicated region
        $region25: #{tpu_custom_call.1} parent=11 // pred_check
          %p264 = pneg %p130
        $region26: #{tpu_custom_call.1} parent=11 // pred_check_branch
          %266 = sbr.rel (%p264) target = $region28
        $region27: #{tpu_custom_call.1} parent=11 // pred_region
          _
        $region28: #{tpu_custom_call.1} parent=11 // pred_fallthru
          _
        // Predicated region
        $region29: #{tpu_custom_call.1} parent=11 // pred_check
          %p267 = pneg %p151
        $region30: #{tpu_custom_call.1} parent=11 // pred_check_branch
          %269 = sbr.rel (%p267) target = $region32
        $region31: #{tpu_custom_call.1} parent=11 // pred_region
          _
        $region32: #{tpu_custom_call.1} parent=11 // pred_fallthru
          _
        // Predicated region
        $region33: #{tpu_custom_call.1} parent=11 // pred_check
          %p270 = pneg %p172
        $region34: #{tpu_custom_call.1} parent=11 // pred_check_branch
          %272 = sbr.rel (%p270) target = $region36
        $region35: #{tpu_custom_call.1} parent=11 // pred_region
          _
        $region36: #{tpu_custom_call.1} parent=11 // pred_fallthru
          _
        // Predicated region
        $region37: #{tpu_custom_call.1} parent=11 // pred_check
          %p273 = pneg %p193
        $region38: #{tpu_custom_call.1} parent=11 // pred_check_branch
          %275 = sbr.rel (%p273) target = $region40
        $region39: #{tpu_custom_call.1} parent=11 // pred_region
          _
        $region40: #{tpu_custom_call.1} parent=11 // pred_fallthru
          _
        // Predicated region
        $region41: #{tpu_custom_call.1} parent=11 // pred_check
          %p276 = pneg %p214
        $region42: #{tpu_custom_call.1} parent=11 // pred_check_branch
          %278 = sbr.rel (%p276) target = $region44
        $region43: #{tpu_custom_call.1} parent=11 // pred_region
          _
        $region44: #{tpu_custom_call.1} parent=11 // pred_fallthru
          _
      $region12: #{tpu_custom_call.1} parent=5 // pred_fallthru
        _
      %p279 = scmp.lt.s32.totalorder %s20, 2
      // Predicated region
      $region45: #{tpu_custom_call.1} parent=5 // pred_check
        %p280 = pneg %p279
      $region46: #{tpu_custom_call.1} parent=5 // pred_check_branch
        %282 = sbr.rel (%p280) target = $region48
      $region47: #{tpu_custom_call.1} parent=5 // pred_region
        // Predicated region
        $region49: #{tpu_custom_call.1} parent=47 // pred_check
          %p283 = pneg %p40
        $region50: #{tpu_custom_call.1} parent=47 // pred_check_branch
          %285 = sbr.rel (%p283) target = $region52
        $region51: #{tpu_custom_call.1} parent=47 // pred_region
          %p286 = scmp.lt.s32.totalorder %s20, 1
          %s287 = scalar_select %p286, %s20, 1
          %s288 = smul.addr %s287, 2
          %s289 = scalar_lea.vmem %s0, %s288
        $region52: #{tpu_custom_call.1} parent=47 // pred_fallthru
          _
      $region48: #{tpu_custom_call.1} parent=5 // pred_fallthru
        _
      %p290 = scmp.le.s32.totalorder 1, %s20
      %p291 = scmp.lt.s32.totalorder %s20, 3
      %p292 = pnand %p290, %p291
      %p293 = pneg %p292
      // Predicated region
      $region53: #{tpu_custom_call.1} parent=5 // pred_check
        _
      $region54: #{tpu_custom_call.1} parent=5 // pred_check_branch
        %295 = sbr.rel (%p292) target = $region56
      $region55: #{tpu_custom_call.1} parent=5 // pred_region
        %s296 = ssub.s32 %s20, 1
        %p297 = scmp.lt.s32.totalorder %s25, 1
        %s298 = scalar_select %p297, %s25, 1
        %s299 = smul.addr %s298, 2
        %s300 = scalar_lea.vmem %s0, %s299
        %p301 = pneg %p46
        %p302 = pneg %p43
        %p303 = pneg %p67
        %p304 = pneg %p64
        %p305 = pneg %p88
        %p306 = pneg %p85
        %p307 = pneg %p109
        %p308 = pneg %p106
        %p309 = pneg %p130
        %p310 = pneg %p127
        %p311 = pneg %p151
        %p312 = pneg %p148
        %p313 = pneg %p172
        %p314 = pneg %p169
        %p315 = pneg %p193
        %p316 = pneg %p190
        %p317 = pneg %p214
        %p318 = pneg %p211
        %p319 = pneg %p240
        %p320 = pneg %p237
        %s321 = sand.u32 %s227, 1
        %s322 = scalar_lea.sflag [#allocation4], %s321
        %s323 = sand.u32 %s227, 1
        %s324 = scalar_lea.vmem [#allocation3], %s323
        %p325 = scmp.lt.s32.totalorder %s25, 1
        %s326 = scalar_select %p325, %s25, 1
        %s327 = smul.addr %s326, 2
        %s328 = scalar_lea.vmem %s0, %s327
        %v329 = vld [vmem:[%s328] sm:$0x3]
        %v330 = vld [vmem:[%s1] sm:$0xff]
        %v331 = vld [vmem:[%s1 + $0x8] sm:$0xff]
        %v332 = vld [vmem:[%s1 + $0x10] sm:$0xff]
        %v333 = vld [vmem:[%s1 + $0x18] sm:$0xff]
        %v334 = vld [vmem:[%s2] sm:$0xff]
        %v335 = vld [vmem:[%s2 + $0x8] sm:$0xff]
        %v336 = vld [vmem:[%s2 + $0x10] sm:$0xff]
        %v337 = vld [vmem:[%s2 + $0x18] sm:$0xff]
        %339 = vset.pattern.permute.xlu0 0
        %340 = vperm.xlu0 %339, %v330
        %v341 = vpop.permute.xlu0 %340
        %344 = vset.pattern.permute.xlu0 0
        %345 = vperm.xlu0 %344, %v331
        %v346 = vpop.permute.xlu0 %345
        %349 = vset.pattern.permute.xlu0 0
        %350 = vperm.xlu0 %349, %v332
        %v351 = vpop.permute.xlu0 %350
        %354 = vset.pattern.permute.xlu0 0
        %355 = vperm.xlu0 %354, %v333
        %v356 = vpop.permute.xlu0 %355
        %v358 = vperm.slane %v329, 0
        %v359 = vmul.f32 %v341, %v358
        %v360 = vmul.f32 %v346, %v358
        %v361 = vmul.f32 %v351, %v358
        %v362 = vmul.f32 %v356, %v358
        %364 = vset.pattern.permute.xlu0 0
        %365 = vperm.xlu0 %364, %v334
        %v366 = vpop.permute.xlu0 %365
        %369 = vset.pattern.permute.xlu0 0
        %370 = vperm.xlu0 %369, %v335
        %v371 = vpop.permute.xlu0 %370
        %374 = vset.pattern.permute.xlu0 0
        %375 = vperm.xlu0 %374, %v336
        %v376 = vpop.permute.xlu0 %375
        %379 = vset.pattern.permute.xlu0 0
        %380 = vperm.xlu0 %379, %v337
        %v381 = vpop.permute.xlu0 %380
        %v383 = vadd.f32 %v366, %v359
        %v384 = vadd.f32 %v371, %v360
        %v385 = vadd.f32 %v376, %v361
        %v386 = vadd.f32 %v381, %v362
        %387 = vset.pattern.permute.xlu0 1
        %388 = vperm.xlu0 %387, %v330
        %v389 = vpop.permute.xlu0 %388
        %391 = vset.pattern.permute.xlu0 1
        %392 = vperm.xlu0 %391, %v331
        %v393 = vpop.permute.xlu0 %392
        %395 = vset.pattern.permute.xlu0 1
        %396 = vperm.xlu0 %395, %v332
        %v397 = vpop.permute.xlu0 %396
        %399 = vset.pattern.permute.xlu0 1
        %400 = vperm.xlu0 %399, %v333
        %v401 = vpop.permute.xlu0 %400
        %v403 = vperm.slane %v329, 1
        %v404 = vmul.f32 %v389, %v403
        %v405 = vmul.f32 %v393, %v403
        %v406 = vmul.f32 %v397, %v403
        %v407 = vmul.f32 %v401, %v403
        %v408 = vadd.f32 %v383, %v404
        %v409 = vadd.f32 %v384, %v405
        %v410 = vadd.f32 %v385, %v406
        %v411 = vadd.f32 %v386, %v407
        %v412 = vand.u32 2147483647, %v408
        %vm413 = vcmp.le.f32.partialorder %v412, 0.7853982
        %vm414 = vcmp.lt.s32.totalorder %v408, 0
        %v415 = vand.u32 %v408, 2139095040
        %v416 = vshrl.u32 %v415, 23
        %v417 = vsub.s32 %v416, 127
        %v418 = vand.u32 2147483647, %v408
        %v419 = vand.u32 %v418, 8388607
        %v420 = vor.u32 %v419, 8388608
        %v421 = vsub.s32 0, %v420
        %v422 = vadd.s32 %v417, 1
        %vm423 = vcmp.gt.s32.totalorder %v422, 0
        %v424 = vsel %vm423, %v422, 0
        %v425 = vshrl.u32 %v424, 5
        %v426 = vand.u32 %v424, 31
        %v427 = vsub.s32 32, %v426
        %v428 = vshrl.u32 683565275, %v427
        %v429 = vshll.u32 683565275, %v426
        %v430 = vshrl.u32 2475754826, %v427
        %v431 = vor.u32 %v429, %v430
        %v432 = vshll.u32 2475754826, %v426
        %v433 = vshrl.u32 2131351028, %v427
        %v434 = vor.u32 %v432, %v433
        %v435 = vshll.u32 2131351028, %v426
        %v436 = vshrl.u32 2102212464, %v427
        %v437 = vor.u32 %v435, %v436
        %v438 = vshll.u32 2102212464, %v426
        %v439 = vshrl.u32 920167782, %v427
        %v440 = vor.u32 %v438, %v439
        %v441 = vshll.u32 920167782, %v426
        %v442 = vshrl.u32 1326507024, %v427
        %v443 = vor.u32 %v441, %v442
        %vm444 = vcmp.lt.s32.totalorder %v425, 1
        %vm445 = vcmp.lt.s32.totalorder %v425, 2
        %vm446 = vcmp.lt.s32.totalorder %v425, 3
        %vm447 = vcmp.lt.s32.totalorder %v425, 4
        %v448 = vsel %vm444, %v428, %v431
        %v449 = vsel %vm447, %v437, 2102212464
        %v450 = vsel %vm446, %v434, %v449
        %v451 = vsel %vm445, %v448, %v450
        %v452 = vsel %vm444, %v431, %v434
        %v453 = vsel %vm447, %v440, 920167782
        %v454 = vsel %vm446, %v437, %v453
        %v455 = vsel %vm445, %v452, %v454
        %v456 = vsel %vm444, %v434, %v437
        %v457 = vsel %vm447, %v443, 1326507024
        %v458 = vsel %vm446, %v440, %v457
        %v459 = vsel %vm445, %v456, %v458
        %v460 = vshll.u32 %v420, 8
        %v461 = vand.u32 %v460, 65535
        %v462 = vshrl.u32 %v460, 16
        %v463 = vand.u32 %v459, 65535
        %v464 = vshrl.u32 %v459, 16
        %v465 = vmul.u32 %v461, %v463
        %v466 = vmul.u32 %v461, %v464
        %v467 = vmul.u32 %v462, %v463
        %v468 = vmul.u32 %v462, %v464
        %v469 = vshll.u32 %v466, 16
        %v470 = vshrl.u32 %v466, 16
        %v471 = vshll.u32 %v467, 16
        %v472 = vshrl.u32 %v467, 16
        %vm473 = vc.u32 %v465, %v469
        %v474 = vsel %vm473, 1, 0
        %v475 = vadd.s32 %v465, %v469
        %v476 = vadd.s32 %v468, %v474
        %vm477 = vc.u32 %v475, %v471
        %v478 = vsel %vm477, 1, 0
        %v479 = vadd.s32 %v475, %v471
        %v480 = vadd.s32 %v476, %v478
        %v481 = vadd.s32 %v480, %v470
        %v482 = vadd.s32 %v481, %v472
        %v483 = vand.u32 %v460, 65535
        %v484 = vshrl.u32 %v460, 16
        %v485 = vand.u32 %v455, 65535
        %v486 = vshrl.u32 %v455, 16
        %v487 = vmul.u32 %v483, %v485
        %v488 = vmul.u32 %v483, %v486
        %v489 = vmul.u32 %v484, %v485
        %v490 = vmul.u32 %v484, %v486
        %v491 = vshll.u32 %v488, 16
        %v492 = vshrl.u32 %v488, 16
        %v493 = vshll.u32 %v489, 16
        %v494 = vshrl.u32 %v489, 16
        %vm495 = vc.u32 %v487, %v491
        %v496 = vsel %vm495, 1, 0
        %v497 = vadd.s32 %v487, %v491
        %v498 = vadd.s32 %v490, %v496
        %vm499 = vc.u32 %v497, %v493
        %v500 = vsel %vm499, 1, 0
        %v501 = vadd.s32 %v497, %v493
        %v502 = vadd.s32 %v498, %v500
        %v503 = vadd.s32 %v502, %v492
        %v504 = vadd.s32 %v503, %v494
        %v505 = vmul.u32 %v460, %v451
        %v506 = vadd.s32 %v482, %v501
        %vm507 = vc.u32 %v482, %v501
        %v508 = vadd.s32 %v504, 1
        %v509 = vsel %vm507, %v508, %v504
        %v510 = vadd.s32 %v505, %v509
        %v511 = vadd.s32 %v510, 536870912
        %v512 = vshrl.u32 %v511, 30
        %v513 = vshll.u32 %v512, 30
        %v514 = vsub.s32 %v510, %v513
        %vm515 = vcmp.lt.s32.totalorder %v514, 0
        %v516 = vsub.s32 0, %v514
        %v517 = vsel %vm515, %v516, %v514
        %v518 = vclz %v517
        %v519 = vsub.s32 %v518, 2
        %vm520 = vcmp.gt.s32.totalorder 0, %v519
        %v521 = vsel %vm520, 0, %v519
        %v522 = vsub.s32 32, %v521
        %v523 = vshll.u32 %v514, %v521
        %v524 = vshrl.u32 %v506, %v522
        %v525 = vor.u32 %v523, %v524
        %v526 = vsub.s32 4294967266, %v521
        %v527 = vadd.s32 %v526, 127
        %v528 = vshll.u32 %v527, 23
        %v529 = vor.u32 4788187, %v528
        %v530 = vand.u32 2147483647, %v529
        %v532 = vcvt.s32.f32 %v525
        %v533 = vmul.f32 %v532, %v530
        %v534 = vxor.u32 %v533, 2147483648
        %v535 = vsel %vm414, %v534, %v533
        %v536 = vsub.s32 4, %v512
        %v537 = vsel %vm414, %v536, %v512
        %v538 = vsel %vm413, %v408, %v535
        %v539 = vsel %vm413, 0, %v537
        %v540 = vmul.f32 %v538, %v538
        %v541 = vmul.f32 %v540, -0.001358992
        %v542 = vadd.f32 %v541, 0.041655596
        %v543 = vmul.f32 %v540, %v542
        %v544 = vadd.f32 %v543, -0.4999988
        %v545 = vmul.f32 %v540, %v544
        %v546 = vadd.f32 1.0, %v545
        %v547 = vmul.f32 %v538, %v538
        %v548 = vmul.f32 %v547, -0.00019511016
        %v549 = vadd.f32 %v548, 0.008332121
        %v550 = vmul.f32 %v547, %v549
        %v551 = vadd.f32 %v550, -0.16666654
        %v552 = vmul.f32 %v547, %v551
        %v553 = vadd.f32 %v552, 1.0
        %v554 = vmul.f32 %v553, %v538
        %vm555 = vweird.f32 %v408
        %v556 = vadd.s32 %v539, 3
        %v557 = vand.u32 %v556, 3
        %vm558 = vcmp.lt.s32.totalorder %v557, 2
        %vm559 = vcmp.eq.s32.totalorder %v557, 0
        %v560 = vxor.u32 %v554, 2147483648
        %v561 = vsel %vm559, %v546, %v560
        %vm562 = vcmp.eq.s32.totalorder %v557, 2
        %v563 = vxor.u32 %v546, 2147483648
        %v564 = vsel %vm562, %v563, %v554
        %v565 = vsel %vm558, %v561, %v564
        %v566 = vsel %vm555, nan, %v565
        %v567 = vand.u32 2147483647, %v409
        %vm568 = vcmp.le.f32.partialorder %v567, 0.7853982
        %vm569 = vcmp.lt.s32.totalorder %v409, 0
        %v570 = vand.u32 %v409, 2139095040
        %v571 = vshrl.u32 %v570, 23
        %v572 = vsub.s32 %v571, 127
        %v573 = vand.u32 2147483647, %v409
        %v574 = vand.u32 %v573, 8388607
        %v575 = vor.u32 %v574, 8388608
        %v576 = vsub.s32 0, %v575
        %v577 = vadd.s32 %v572, 1
        %vm578 = vcmp.gt.s32.totalorder %v577, 0
        %v579 = vsel %vm578, %v577, 0
        %v580 = vshrl.u32 %v579, 5
        %v581 = vand.u32 %v579, 31
        %v582 = vsub.s32 32, %v581
        %v583 = vshrl.u32 683565275, %v582
        %v584 = vshll.u32 683565275, %v581
        %v585 = vshrl.u32 2475754826, %v582
        %v586 = vor.u32 %v584, %v585
        %v587 = vshll.u32 2475754826, %v581
        %v588 = vshrl.u32 2131351028, %v582
        %v589 = vor.u32 %v587, %v588
        %v590 = vshll.u32 2131351028, %v581
        %v591 = vshrl.u32 2102212464, %v582
        %v592 = vor.u32 %v590, %v591
        %v593 = vshll.u32 2102212464, %v581
        %v594 = vshrl.u32 920167782, %v582
        %v595 = vor.u32 %v593, %v594
        %v596 = vshll.u32 920167782, %v581
        %v597 = vshrl.u32 1326507024, %v582
        %v598 = vor.u32 %v596, %v597
        %vm599 = vcmp.lt.s32.totalorder %v580, 1
        %vm600 = vcmp.lt.s32.totalorder %v580, 2
        %vm601 = vcmp.lt.s32.totalorder %v580, 3
        %vm602 = vcmp.lt.s32.totalorder %v580, 4
        %v603 = vsel %vm599, %v583, %v586
        %v604 = vsel %vm602, %v592, 2102212464
        %v605 = vsel %vm601, %v589, %v604
        %v606 = vsel %vm600, %v603, %v605
        %v607 = vsel %vm599, %v586, %v589
        %v608 = vsel %vm602, %v595, 920167782
        %v609 = vsel %vm601, %v592, %v608
        %v610 = vsel %vm600, %v607, %v609
        %v611 = vsel %vm599, %v589, %v592
        %v612 = vsel %vm602, %v598, 1326507024
        %v613 = vsel %vm601, %v595, %v612
        %v614 = vsel %vm600, %v611, %v613
        %v615 = vshll.u32 %v575, 8
        %v616 = vand.u32 %v615, 65535
        %v617 = vshrl.u32 %v615, 16
        %v618 = vand.u32 %v614, 65535
        %v619 = vshrl.u32 %v614, 16
        %v620 = vmul.u32 %v616, %v618
        %v621 = vmul.u32 %v616, %v619
        %v622 = vmul.u32 %v617, %v618
        %v623 = vmul.u32 %v617, %v619
        %v624 = vshll.u32 %v621, 16
        %v625 = vshrl.u32 %v621, 16
        %v626 = vshll.u32 %v622, 16
        %v627 = vshrl.u32 %v622, 16
        %vm628 = vc.u32 %v620, %v624
        %v629 = vsel %vm628, 1, 0
        %v630 = vadd.s32 %v620, %v624
        %v631 = vadd.s32 %v623, %v629
        %vm632 = vc.u32 %v630, %v626
        %v633 = vsel %vm632, 1, 0
        %v634 = vadd.s32 %v630, %v626
        %v635 = vadd.s32 %v631, %v633
        %v636 = vadd.s32 %v635, %v625
        %v637 = vadd.s32 %v636, %v627
        %v638 = vand.u32 %v615, 65535
        %v639 = vshrl.u32 %v615, 16
        %v640 = vand.u32 %v610, 65535
        %v641 = vshrl.u32 %v610, 16
        %v642 = vmul.u32 %v638, %v640
        %v643 = vmul.u32 %v638, %v641
        %v644 = vmul.u32 %v639, %v640
        %v645 = vmul.u32 %v639, %v641
        %v646 = vshll.u32 %v643, 16
        %v647 = vshrl.u32 %v643, 16
        %v648 = vshll.u32 %v644, 16
        %v649 = vshrl.u32 %v644, 16
        %vm650 = vc.u32 %v642, %v646
        %v651 = vsel %vm650, 1, 0
        %v652 = vadd.s32 %v642, %v646
        %v653 = vadd.s32 %v645, %v651
        %vm654 = vc.u32 %v652, %v648
        %v655 = vsel %vm654, 1, 0
        %v656 = vadd.s32 %v652, %v648
        %v657 = vadd.s32 %v653, %v655
        %v658 = vadd.s32 %v657, %v647
        %v659 = vadd.s32 %v658, %v649
        %v660 = vmul.u32 %v615, %v606
        %v661 = vadd.s32 %v637, %v656
        %vm662 = vc.u32 %v637, %v656
        %v663 = vadd.s32 %v659, 1
        %v664 = vsel %vm662, %v663, %v659
        %v665 = vadd.s32 %v660, %v664
        %v666 = vadd.s32 %v665, 536870912
        %v667 = vshrl.u32 %v666, 30
        %v668 = vshll.u32 %v667, 30
        %v669 = vsub.s32 %v665, %v668
        %vm670 = vcmp.lt.s32.totalorder %v669, 0
        %v671 = vsub.s32 0, %v669
        %v672 = vsel %vm670, %v671, %v669
        %v673 = vclz %v672
        %v674 = vsub.s32 %v673, 2
        %vm675 = vcmp.gt.s32.totalorder 0, %v674
        %v676 = vsel %vm675, 0, %v674
        %v677 = vsub.s32 32, %v676
        %v678 = vshll.u32 %v669, %v676
        %v679 = vshrl.u32 %v661, %v677
        %v680 = vor.u32 %v678, %v679
        %v681 = vsub.s32 4294967266, %v676
        %v682 = vadd.s32 %v681, 127
        %v683 = vshll.u32 %v682, 23
        %v684 = vor.u32 4788187, %v683
        %v685 = vand.u32 2147483647, %v684
        %v687 = vcvt.s32.f32 %v680
        %v688 = vmul.f32 %v687, %v685
        %v689 = vxor.u32 %v688, 2147483648
        %v690 = vsel %vm569, %v689, %v688
        %v691 = vsub.s32 4, %v667
        %v692 = vsel %vm569, %v691, %v667
        %v693 = vsel %vm568, %v409, %v690
        %v694 = vsel %vm568, 0, %v692
        %v695 = vmul.f32 %v693, %v693
        %v696 = vmul.f32 %v695, -0.001358992
        %v697 = vadd.f32 %v696, 0.041655596
        %v698 = vmul.f32 %v695, %v697
        %v699 = vadd.f32 %v698, -0.4999988
        %v700 = vmul.f32 %v695, %v699
        %v701 = vadd.f32 1.0, %v700
        %v702 = vmul.f32 %v693, %v693
        %v703 = vmul.f32 %v702, -0.00019511016
        %v704 = vadd.f32 %v703, 0.008332121
        %v705 = vmul.f32 %v702, %v704
        %v706 = vadd.f32 %v705, -0.16666654
        %v707 = vmul.f32 %v702, %v706
        %v708 = vadd.f32 %v707, 1.0
        %v709 = vmul.f32 %v708, %v693
        %vm710 = vweird.f32 %v409
        %v711 = vadd.s32 %v694, 3
        %v712 = vand.u32 %v711, 3
        %vm713 = vcmp.lt.s32.totalorder %v712, 2
        %vm714 = vcmp.eq.s32.totalorder %v712, 0
        %v715 = vxor.u32 %v709, 2147483648
        %v716 = vsel %vm714, %v701, %v715
        %vm717 = vcmp.eq.s32.totalorder %v712, 2
        %v718 = vxor.u32 %v701, 2147483648
        %v719 = vsel %vm717, %v718, %v709
        %v720 = vsel %vm713, %v716, %v719
        %v721 = vsel %vm710, nan, %v720
        %v722 = vand.u32 2147483647, %v410
        %vm723 = vcmp.le.f32.partialorder %v722, 0.7853982
        %vm724 = vcmp.lt.s32.totalorder %v410, 0
        %v725 = vand.u32 %v410, 2139095040
        %v726 = vshrl.u32 %v725, 23
        %v727 = vsub.s32 %v726, 127
        %v728 = vand.u32 2147483647, %v410
        %v729 = vand.u32 %v728, 8388607
        %v730 = vor.u32 %v729, 8388608
        %v731 = vsub.s32 0, %v730
        %v732 = vadd.s32 %v727, 1
        %vm733 = vcmp.gt.s32.totalorder %v732, 0
        %v734 = vsel %vm733, %v732, 0
        %v735 = vshrl.u32 %v734, 5
        %v736 = vand.u32 %v734, 31
        %v737 = vsub.s32 32, %v736
        %v738 = vshrl.u32 683565275, %v737
        %v739 = vshll.u32 683565275, %v736
        %v740 = vshrl.u32 2475754826, %v737
        %v741 = vor.u32 %v739, %v740
        %v742 = vshll.u32 2475754826, %v736
        %v743 = vshrl.u32 2131351028, %v737
        %v744 = vor.u32 %v742, %v743
        %v745 = vshll.u32 2131351028, %v736
        %v746 = vshrl.u32 2102212464, %v737
        %v747 = vor.u32 %v745, %v746
        %v748 = vshll.u32 2102212464, %v736
        %v749 = vshrl.u32 920167782, %v737
        %v750 = vor.u32 %v748, %v749
        %v751 = vshll.u32 920167782, %v736
        %v752 = vshrl.u32 1326507024, %v737
        %v753 = vor.u32 %v751, %v752
        %vm754 = vcmp.lt.s32.totalorder %v735, 1
        %vm755 = vcmp.lt.s32.totalorder %v735, 2
        %vm756 = vcmp.lt.s32.totalorder %v735, 3
        %vm757 = vcmp.lt.s32.totalorder %v735, 4
        %v758 = vsel %vm754, %v738, %v741
        %v759 = vsel %vm757, %v747, 2102212464
        %v760 = vsel %vm756, %v744, %v759
        %v761 = vsel %vm755, %v758, %v760
        %v762 = vsel %vm754, %v741, %v744
        %v763 = vsel %vm757, %v750, 920167782
        %v764 = vsel %vm756, %v747, %v763
        %v765 = vsel %vm755, %v762, %v764
        %v766 = vsel %vm754, %v744, %v747
        %v767 = vsel %vm757, %v753, 1326507024
        %v768 = vsel %vm756, %v750, %v767
        %v769 = vsel %vm755, %v766, %v768
        %v770 = vshll.u32 %v730, 8
        %v771 = vand.u32 %v770, 65535
        %v772 = vshrl.u32 %v770, 16
        %v773 = vand.u32 %v769, 65535
        %v774 = vshrl.u32 %v769, 16
        %v775 = vmul.u32 %v771, %v773
        %v776 = vmul.u32 %v771, %v774
        %v777 = vmul.u32 %v772, %v773
        %v778 = vmul.u32 %v772, %v774
        %v779 = vshll.u32 %v776, 16
        %v780 = vshrl.u32 %v776, 16
        %v781 = vshll.u32 %v777, 16
        %v782 = vshrl.u32 %v777, 16
        %vm783 = vc.u32 %v775, %v779
        %v784 = vsel %vm783, 1, 0
        %v785 = vadd.s32 %v775, %v779
        %v786 = vadd.s32 %v778, %v784
        %vm787 = vc.u32 %v785, %v781
        %v788 = vsel %vm787, 1, 0
        %v789 = vadd.s32 %v785, %v781
        %v790 = vadd.s32 %v786, %v788
        %v791 = vadd.s32 %v790, %v780
        %v792 = vadd.s32 %v791, %v782
        %v793 = vand.u32 %v770, 65535
        %v794 = vshrl.u32 %v770, 16
        %v795 = vand.u32 %v765, 65535
        %v796 = vshrl.u32 %v765, 16
        %v797 = vmul.u32 %v793, %v795
        %v798 = vmul.u32 %v793, %v796
        %v799 = vmul.u32 %v794, %v795
        %v800 = vmul.u32 %v794, %v796
        %v801 = vshll.u32 %v798, 16
        %v802 = vshrl.u32 %v798, 16
        %v803 = vshll.u32 %v799, 16
        %v804 = vshrl.u32 %v799, 16
        %vm805 = vc.u32 %v797, %v801
        %v806 = vsel %vm805, 1, 0
        %v807 = vadd.s32 %v797, %v801
        %v808 = vadd.s32 %v800, %v806
        %vm809 = vc.u32 %v807, %v803
        %v810 = vsel %vm809, 1, 0
        %v811 = vadd.s32 %v807, %v803
        %v812 = vadd.s32 %v808, %v810
        %v813 = vadd.s32 %v812, %v802
        %v814 = vadd.s32 %v813, %v804
        %v815 = vmul.u32 %v770, %v761
        %v816 = vadd.s32 %v792, %v811
        %vm817 = vc.u32 %v792, %v811
        %v818 = vadd.s32 %v814, 1
        %v819 = vsel %vm817, %v818, %v814
        %v820 = vadd.s32 %v815, %v819
        %v821 = vadd.s32 %v820, 536870912
        %v822 = vshrl.u32 %v821, 30
        %v823 = vshll.u32 %v822, 30
        %v824 = vsub.s32 %v820, %v823
        %vm825 = vcmp.lt.s32.totalorder %v824, 0
        %v826 = vsub.s32 0, %v824
        %v827 = vsel %vm825, %v826, %v824
        %v828 = vclz %v827
        %v829 = vsub.s32 %v828, 2
        %vm830 = vcmp.gt.s32.totalorder 0, %v829
        %v831 = vsel %vm830, 0, %v829
        %v832 = vsub.s32 32, %v831
        %v833 = vshll.u32 %v824, %v831
        %v834 = vshrl.u32 %v816, %v832
        %v835 = vor.u32 %v833, %v834
        %v836 = vsub.s32 4294967266, %v831
        %v837 = vadd.s32 %v836, 127
        %v838 = vshll.u32 %v837, 23
        %v839 = vor.u32 4788187, %v838
        %v840 = vand.u32 2147483647, %v839
        %v842 = vcvt.s32.f32 %v835
        %v843 = vmul.f32 %v842, %v840
        %v844 = vxor.u32 %v843, 2147483648
        %v845 = vsel %vm724, %v844, %v843
        %v846 = vsub.s32 4, %v822
        %v847 = vsel %vm724, %v846, %v822
        %v848 = vsel %vm723, %v410, %v845
        %v849 = vsel %vm723, 0, %v847
        %v850 = vmul.f32 %v848, %v848
        %v851 = vmul.f32 %v850, -0.001358992
        %v852 = vadd.f32 %v851, 0.041655596
        %v853 = vmul.f32 %v850, %v852
        %v854 = vadd.f32 %v853, -0.4999988
        %v855 = vmul.f32 %v850, %v854
        %v856 = vadd.f32 1.0, %v855
        %v857 = vmul.f32 %v848, %v848
        %v858 = vmul.f32 %v857, -0.00019511016
        %v859 = vadd.f32 %v858, 0.008332121
        %v860 = vmul.f32 %v857, %v859
        %v861 = vadd.f32 %v860, -0.16666654
        %v862 = vmul.f32 %v857, %v861
        %v863 = vadd.f32 %v862, 1.0
        %v864 = vmul.f32 %v863, %v848
        %vm865 = vweird.f32 %v410
        %v866 = vadd.s32 %v849, 3
        %v867 = vand.u32 %v866, 3
        %vm868 = vcmp.lt.s32.totalorder %v867, 2
        %vm869 = vcmp.eq.s32.totalorder %v867, 0
        %v870 = vxor.u32 %v864, 2147483648
        %v871 = vsel %vm869, %v856, %v870
        %vm872 = vcmp.eq.s32.totalorder %v867, 2
        %v873 = vxor.u32 %v856, 2147483648
        %v874 = vsel %vm872, %v873, %v864
        %v875 = vsel %vm868, %v871, %v874
        %v876 = vsel %vm865, nan, %v875
        %v877 = vand.u32 2147483647, %v411
        %vm878 = vcmp.le.f32.partialorder %v877, 0.7853982
        %vm879 = vcmp.lt.s32.totalorder %v411, 0
        %v880 = vand.u32 %v411, 2139095040
        %v881 = vshrl.u32 %v880, 23
        %v882 = vsub.s32 %v881, 127
        %v883 = vand.u32 2147483647, %v411
        %v884 = vand.u32 %v883, 8388607
        %v885 = vor.u32 %v884, 8388608
        %v886 = vsub.s32 0, %v885
        %v887 = vadd.s32 %v882, 1
        %vm888 = vcmp.gt.s32.totalorder %v887, 0
        %v889 = vsel %vm888, %v887, 0
        %v890 = vshrl.u32 %v889, 5
        %v891 = vand.u32 %v889, 31
        %v892 = vsub.s32 32, %v891
        %v893 = vshrl.u32 683565275, %v892
        %v894 = vshll.u32 683565275, %v891
        %v895 = vshrl.u32 2475754826, %v892
        %v896 = vor.u32 %v894, %v895
        %v897 = vshll.u32 2475754826, %v891
        %v898 = vshrl.u32 2131351028, %v892
        %v899 = vor.u32 %v897, %v898
        %v900 = vshll.u32 2131351028, %v891
        %v901 = vshrl.u32 2102212464, %v892
        %v902 = vor.u32 %v900, %v901
        %v903 = vshll.u32 2102212464, %v891
        %v904 = vshrl.u32 920167782, %v892
        %v905 = vor.u32 %v903, %v904
        %v906 = vshll.u32 920167782, %v891
        %v907 = vshrl.u32 1326507024, %v892
        %v908 = vor.u32 %v906, %v907
        %vm909 = vcmp.lt.s32.totalorder %v890, 1
        %vm910 = vcmp.lt.s32.totalorder %v890, 2
        %vm911 = vcmp.lt.s32.totalorder %v890, 3
        %vm912 = vcmp.lt.s32.totalorder %v890, 4
        %v913 = vsel %vm909, %v893, %v896
        %v914 = vsel %vm912, %v902, 2102212464
        %v915 = vsel %vm911, %v899, %v914
        %v916 = vsel %vm910, %v913, %v915
        %v917 = vsel %vm909, %v896, %v899
        %v918 = vsel %vm912, %v905, 920167782
        %v919 = vsel %vm911, %v902, %v918
        %v920 = vsel %vm910, %v917, %v919
        %v921 = vsel %vm909, %v899, %v902
        %v922 = vsel %vm912, %v908, 1326507024
        %v923 = vsel %vm911, %v905, %v922
        %v924 = vsel %vm910, %v921, %v923
        %v925 = vshll.u32 %v885, 8
        %v926 = vand.u32 %v925, 65535
        %v927 = vshrl.u32 %v925, 16
        %v928 = vand.u32 %v924, 65535
        %v929 = vshrl.u32 %v924, 16
        %v930 = vmul.u32 %v926, %v928
        %v931 = vmul.u32 %v926, %v929
        %v932 = vmul.u32 %v927, %v928
        %v933 = vmul.u32 %v927, %v929
        %v934 = vshll.u32 %v931, 16
        %v935 = vshrl.u32 %v931, 16
        %v936 = vshll.u32 %v932, 16
        %v937 = vshrl.u32 %v932, 16
        %vm938 = vc.u32 %v930, %v934
        %v939 = vsel %vm938, 1, 0
        %v940 = vadd.s32 %v930, %v934
        %v941 = vadd.s32 %v933, %v939
        %vm942 = vc.u32 %v940, %v936
        %v943 = vsel %vm942, 1, 0
        %v944 = vadd.s32 %v940, %v936
        %v945 = vadd.s32 %v941, %v943
        %v946 = vadd.s32 %v945, %v935
        %v947 = vadd.s32 %v946, %v937
        %v948 = vand.u32 %v925, 65535
        %v949 = vshrl.u32 %v925, 16
        %v950 = vand.u32 %v920, 65535
        %v951 = vshrl.u32 %v920, 16
        %v952 = vmul.u32 %v948, %v950
        %v953 = vmul.u32 %v948, %v951
        %v954 = vmul.u32 %v949, %v950
        %v955 = vmul.u32 %v949, %v951
        %v956 = vshll.u32 %v953, 16
        %v957 = vshrl.u32 %v953, 16
        %v958 = vshll.u32 %v954, 16
        %v959 = vshrl.u32 %v954, 16
        %vm960 = vc.u32 %v952, %v956
        %v961 = vsel %vm960, 1, 0
        %v962 = vadd.s32 %v952, %v956
        %v963 = vadd.s32 %v955, %v961
        %vm964 = vc.u32 %v962, %v958
        %v965 = vsel %vm964, 1, 0
        %v966 = vadd.s32 %v962, %v958
        %v967 = vadd.s32 %v963, %v965
        %v968 = vadd.s32 %v967, %v957
        %v969 = vadd.s32 %v968, %v959
        %v970 = vmul.u32 %v925, %v916
        %v971 = vadd.s32 %v947, %v966
        %vm972 = vc.u32 %v947, %v966
        %v973 = vadd.s32 %v969, 1
        %v974 = vsel %vm972, %v973, %v969
        %v975 = vadd.s32 %v970, %v974
        %v976 = vadd.s32 %v975, 536870912
        %v977 = vshrl.u32 %v976, 30
        %v978 = vshll.u32 %v977, 30
        %v979 = vsub.s32 %v975, %v978
        %vm980 = vcmp.lt.s32.totalorder %v979, 0
        %v981 = vsub.s32 0, %v979
        %v982 = vsel %vm980, %v981, %v979
        %v983 = vclz %v982
        %v984 = vsub.s32 %v983, 2
        %vm985 = vcmp.gt.s32.totalorder 0, %v984
        %v986 = vsel %vm985, 0, %v984
        %v987 = vsub.s32 32, %v986
        %v988 = vshll.u32 %v979, %v986
        %v989 = vshrl.u32 %v971, %v987
        %v990 = vor.u32 %v988, %v989
        %v991 = vsub.s32 4294967266, %v986
        %v992 = vadd.s32 %v991, 127
        %v993 = vshll.u32 %v992, 23
        %v994 = vor.u32 4788187, %v993
        %v995 = vand.u32 2147483647, %v994
        %v997 = vcvt.s32.f32 %v990
        %v998 = vmul.f32 %v997, %v995
        %v999 = vxor.u32 %v998, 2147483648
        %v1000 = vsel %vm879, %v999, %v998
        %v1001 = vsub.s32 4, %v977
        %v1002 = vsel %vm879, %v1001, %v977
        %v1003 = vsel %vm878, %v411, %v1000
        %v1004 = vsel %vm878, 0, %v1002
        %v1005 = vmul.f32 %v1003, %v1003
        %v1006 = vmul.f32 %v1005, -0.001358992
        %v1007 = vadd.f32 %v1006, 0.041655596
        %v1008 = vmul.f32 %v1005, %v1007
        %v1009 = vadd.f32 %v1008, -0.4999988
        %v1010 = vmul.f32 %v1005, %v1009
        %v1011 = vadd.f32 1.0, %v1010
        %v1012 = vmul.f32 %v1003, %v1003
        %v1013 = vmul.f32 %v1012, -0.00019511016
        %v1014 = vadd.f32 %v1013, 0.008332121
        %v1015 = vmul.f32 %v1012, %v1014
        %v1016 = vadd.f32 %v1015, -0.16666654
        %v1017 = vmul.f32 %v1012, %v1016
        %v1018 = vadd.f32 %v1017, 1.0
        %v1019 = vmul.f32 %v1018, %v1003
        %vm1020 = vweird.f32 %v411
        %v1021 = vadd.s32 %v1004, 3
        %v1022 = vand.u32 %v1021, 3
        %vm1023 = vcmp.lt.s32.totalorder %v1022, 2
        %vm1024 = vcmp.eq.s32.totalorder %v1022, 0
        %v1025 = vxor.u32 %v1019, 2147483648
        %v1026 = vsel %vm1024, %v1011, %v1025
        %vm1027 = vcmp.eq.s32.totalorder %v1022, 2
        %v1028 = vxor.u32 %v1011, 2147483648
        %v1029 = vsel %vm1027, %v1028, %v1019
        %v1030 = vsel %vm1023, %v1026, %v1029
        %v1031 = vsel %vm1020, nan, %v1030
        %v1032 = vld [vmem:[%s3] sm:$0xff]
        %v1033 = vld [vmem:[%s3 + $0x8] sm:$0xff]
        %v1034 = vld [vmem:[%s3 + $0x10] sm:$0xff]
        %v1035 = vld [vmem:[%s3 + $0x18] sm:$0xff]
        %v1036 = vld [vmem:[%s4] sm:$0xff]
        %v1037 = vld [vmem:[%s4 + $0x8] sm:$0xff]
        %v1038 = vld [vmem:[%s4 + $0x10] sm:$0xff]
        %v1039 = vld [vmem:[%s4 + $0x18] sm:$0xff]
        %1041 = vset.pattern.permute.xlu0 0
        %1042 = vperm.xlu0 %1041, %v1036
        %v1043 = vpop.permute.xlu0 %1042
        %1046 = vset.pattern.permute.xlu0 0
        %1047 = vperm.xlu0 %1046, %v1037
        %v1048 = vpop.permute.xlu0 %1047
        %1051 = vset.pattern.permute.xlu0 0
        %1052 = vperm.xlu0 %1051, %v1038
        %v1053 = vpop.permute.xlu0 %1052
        %1056 = vset.pattern.permute.xlu0 0
        %1057 = vperm.xlu0 %1056, %v1039
        %v1058 = vpop.permute.xlu0 %1057
        %vm1060 = vcmask 261120
        %v1062 = vsel %vm1060, %v1032, 0
        %v1065 = vsel %vm1060, %v1033, 0
        %v1068 = vsel %vm1060, %v1034, 0
        %v1071 = vsel %vm1060, %v1035, 0
        %1073 = vmatpush.msra.mxu0 0.0
        %1074 = vmatpush.msra.mxu0 0.0
        %1075 = vmatpush.msra.mxu0 0.0
        %1076 = vmatpush.msra.mxu0 0.0
        %1077 = vmatpush.msra.mxu0 0.0
        %1078 = vmatpush.msra.mxu0 0.0
        %1079 = vmatpush.msra.mxu0 0.0
        %1080 = vmatpush.msra.mxu0 0.0
        %1081 = vmatpush.msra.mxu0 0.0
        %1082 = vmatpush.msra.mxu0 0.0
        %1083 = vmatpush.msra.mxu0 0.0
        %1084 = vmatpush.msra.mxu0 0.0
        %1085 = vmatpush.msra.mxu0 %v1031
        %1086 = vmatpush.msra.mxu0 %v876
        %1087 = vmatpush.msra.mxu0 %v721
        %1088 = vmatpush.msra.mxu0 %v566
        %1089 = vmatmul.f32.gmra.mxu0 %v1062
        %v1090 = vpop.f32.mrf.mxu0
        %v1091 = vadd.f32 %v1043, %v1090
        %1092 = vmatmul.f32.gmra.mxu0 %v1065
        %v1093 = vpop.f32.mrf.mxu0
        %v1094 = vadd.f32 %v1048, %v1093
        %1095 = vmatmul.f32.gmra.mxu0 %v1068
        %v1096 = vpop.f32.mrf.mxu0
        %v1097 = vadd.f32 %v1053, %v1096
        %1098 = vmatmul.f32.gmra.mxu0 %v1071
        %v1099 = vpop.f32.mrf.mxu0
        %v1100 = vadd.f32 %v1058, %v1099
        %1101 = vdwg.mxu0
        %v1102 = vand.u32 2147483647, %v1091
        %vm1103 = vcmp.le.f32.partialorder %v1102, 0.7853982
        %vm1104 = vcmp.lt.s32.totalorder %v1091, 0
        %v1105 = vand.u32 %v1091, 2139095040
        %v1106 = vshrl.u32 %v1105, 23
        %v1107 = vsub.s32 %v1106, 127
        %v1108 = vand.u32 2147483647, %v1091
        %v1109 = vand.u32 %v1108, 8388607
        %v1110 = vor.u32 %v1109, 8388608
        %v1111 = vsub.s32 0, %v1110
        %v1112 = vadd.s32 %v1107, 1
        %vm1113 = vcmp.gt.s32.totalorder %v1112, 0
        %v1114 = vsel %vm1113, %v1112, 0
        %v1115 = vshrl.u32 %v1114, 5
        %v1116 = vand.u32 %v1114, 31
        %v1117 = vsub.s32 32, %v1116
        %v1118 = vshrl.u32 683565275, %v1117
        %v1119 = vshll.u32 683565275, %v1116
        %v1120 = vshrl.u32 2475754826, %v1117
        %v1121 = vor.u32 %v1119, %v1120
        %v1122 = vshll.u32 2475754826, %v1116
        %v1123 = vshrl.u32 2131351028, %v1117
        %v1124 = vor.u32 %v1122, %v1123
        %v1125 = vshll.u32 2131351028, %v1116
        %v1126 = vshrl.u32 2102212464, %v1117
        %v1127 = vor.u32 %v1125, %v1126
        %v1128 = vshll.u32 2102212464, %v1116
        %v1129 = vshrl.u32 920167782, %v1117
        %v1130 = vor.u32 %v1128, %v1129
        %v1131 = vshll.u32 920167782, %v1116
        %v1132 = vshrl.u32 1326507024, %v1117
        %v1133 = vor.u32 %v1131, %v1132
        %vm1134 = vcmp.lt.s32.totalorder %v1115, 1
        %vm1135 = vcmp.lt.s32.totalorder %v1115, 2
        %vm1136 = vcmp.lt.s32.totalorder %v1115, 3
        %vm1137 = vcmp.lt.s32.totalorder %v1115, 4
        %v1138 = vsel %vm1134, %v1118, %v1121
        %v1139 = vsel %vm1137, %v1127, 2102212464
        %v1140 = vsel %vm1136, %v1124, %v1139
        %v1141 = vsel %vm1135, %v1138, %v1140
        %v1142 = vsel %vm1134, %v1121, %v1124
        %v1143 = vsel %vm1137, %v1130, 920167782
        %v1144 = vsel %vm1136, %v1127, %v1143
        %v1145 = vsel %vm1135, %v1142, %v1144
        %v1146 = vsel %vm1134, %v1124, %v1127
        %v1147 = vsel %vm1137, %v1133, 1326507024
        %v1148 = vsel %vm1136, %v1130, %v1147
        %v1149 = vsel %vm1135, %v1146, %v1148
        %v1150 = vshll.u32 %v1110, 8
        %v1151 = vand.u32 %v1150, 65535
        %v1152 = vshrl.u32 %v1150, 16
        %v1153 = vand.u32 %v1149, 65535
        %v1154 = vshrl.u32 %v1149, 16
        %v1155 = vmul.u32 %v1151, %v1153
        %v1156 = vmul.u32 %v1151, %v1154
        %v1157 = vmul.u32 %v1152, %v1153
        %v1158 = vmul.u32 %v1152, %v1154
        %v1159 = vshll.u32 %v1156, 16
        %v1160 = vshrl.u32 %v1156, 16
        %v1161 = vshll.u32 %v1157, 16
        %v1162 = vshrl.u32 %v1157, 16
        %vm1163 = vc.u32 %v1155, %v1159
        %v1164 = vsel %vm1163, 1, 0
        %v1165 = vadd.s32 %v1155, %v1159
        %v1166 = vadd.s32 %v1158, %v1164
        %vm1167 = vc.u32 %v1165, %v1161
        %v1168 = vsel %vm1167, 1, 0
        %v1169 = vadd.s32 %v1165, %v1161
        %v1170 = vadd.s32 %v1166, %v1168
        %v1171 = vadd.s32 %v1170, %v1160
        %v1172 = vadd.s32 %v1171, %v1162
        %v1173 = vand.u32 %v1150, 65535
        %v1174 = vshrl.u32 %v1150, 16
        %v1175 = vand.u32 %v1145, 65535
        %v1176 = vshrl.u32 %v1145, 16
        %v1177 = vmul.u32 %v1173, %v1175
        %v1178 = vmul.u32 %v1173, %v1176
        %v1179 = vmul.u32 %v1174, %v1175
        %v1180 = vmul.u32 %v1174, %v1176
        %v1181 = vshll.u32 %v1178, 16
        %v1182 = vshrl.u32 %v1178, 16
        %v1183 = vshll.u32 %v1179, 16
        %v1184 = vshrl.u32 %v1179, 16
        %vm1185 = vc.u32 %v1177, %v1181
        %v1186 = vsel %vm1185, 1, 0
        %v1187 = vadd.s32 %v1177, %v1181
        %v1188 = vadd.s32 %v1180, %v1186
        %vm1189 = vc.u32 %v1187, %v1183
        %v1190 = vsel %vm1189, 1, 0
        %v1191 = vadd.s32 %v1187, %v1183
        %v1192 = vadd.s32 %v1188, %v1190
        %v1193 = vadd.s32 %v1192, %v1182
        %v1194 = vadd.s32 %v1193, %v1184
        %v1195 = vmul.u32 %v1150, %v1141
        %v1196 = vadd.s32 %v1172, %v1191
        %vm1197 = vc.u32 %v1172, %v1191
        %v1198 = vadd.s32 %v1194, 1
        %v1199 = vsel %vm1197, %v1198, %v1194
        %v1200 = vadd.s32 %v1195, %v1199
        %v1201 = vadd.s32 %v1200, 536870912
        %v1202 = vshrl.u32 %v1201, 30
        %v1203 = vshll.u32 %v1202, 30
        %v1204 = vsub.s32 %v1200, %v1203
        %vm1205 = vcmp.lt.s32.totalorder %v1204, 0
        %v1206 = vsub.s32 0, %v1204
        %v1207 = vsel %vm1205, %v1206, %v1204
        %v1208 = vclz %v1207
        %v1209 = vsub.s32 %v1208, 2
        %vm1210 = vcmp.gt.s32.totalorder 0, %v1209
        %v1211 = vsel %vm1210, 0, %v1209
        %v1212 = vsub.s32 32, %v1211
        %v1213 = vshll.u32 %v1204, %v1211
        %v1214 = vshrl.u32 %v1196, %v1212
        %v1215 = vor.u32 %v1213, %v1214
        %v1216 = vsub.s32 4294967266, %v1211
        %v1217 = vadd.s32 %v1216, 127
        %v1218 = vshll.u32 %v1217, 23
        %v1219 = vor.u32 4788187, %v1218
        %v1220 = vand.u32 2147483647, %v1219
        %v1222 = vcvt.s32.f32 %v1215
        %v1223 = vmul.f32 %v1222, %v1220
        %v1224 = vxor.u32 %v1223, 2147483648
        %v1225 = vsel %vm1104, %v1224, %v1223
        %v1226 = vsub.s32 4, %v1202
        %v1227 = vsel %vm1104, %v1226, %v1202
        %v1228 = vsel %vm1103, %v1091, %v1225
        %v1229 = vsel %vm1103, 0, %v1227
        %v1230 = vmul.f32 %v1228, %v1228
        %v1231 = vmul.f32 %v1230, -0.001358992
        %v1232 = vadd.f32 %v1231, 0.041655596
        %v1233 = vmul.f32 %v1230, %v1232
        %v1234 = vadd.f32 %v1233, -0.4999988
        %v1235 = vmul.f32 %v1230, %v1234
        %v1236 = vadd.f32 1.0, %v1235
        %v1237 = vmul.f32 %v1228, %v1228
        %v1238 = vmul.f32 %v1237, -0.00019511016
        %v1239 = vadd.f32 %v1238, 0.008332121
        %v1240 = vmul.f32 %v1237, %v1239
        %v1241 = vadd.f32 %v1240, -0.16666654
        %v1242 = vmul.f32 %v1237, %v1241
        %v1243 = vadd.f32 %v1242, 1.0
        %v1244 = vmul.f32 %v1243, %v1228
        %vm1245 = vweird.f32 %v1091
        %v1246 = vadd.s32 %v1229, 3
        %v1247 = vand.u32 %v1246, 3
        %vm1248 = vcmp.lt.s32.totalorder %v1247, 2
        %vm1249 = vcmp.eq.s32.totalorder %v1247, 0
        %v1250 = vxor.u32 %v1244, 2147483648
        %v1251 = vsel %vm1249, %v1236, %v1250
        %vm1252 = vcmp.eq.s32.totalorder %v1247, 2
        %v1253 = vxor.u32 %v1236, 2147483648
        %v1254 = vsel %vm1252, %v1253, %v1244
        %v1255 = vsel %vm1248, %v1251, %v1254
        %v1256 = vsel %vm1245, nan, %v1255
        %v1257 = vand.u32 2147483647, %v1094
        %vm1258 = vcmp.le.f32.partialorder %v1257, 0.7853982
        %vm1259 = vcmp.lt.s32.totalorder %v1094, 0
        %v1260 = vand.u32 %v1094, 2139095040
        %v1261 = vshrl.u32 %v1260, 23
        %v1262 = vsub.s32 %v1261, 127
        %v1263 = vand.u32 2147483647, %v1094
        %v1264 = vand.u32 %v1263, 8388607
        %v1265 = vor.u32 %v1264, 8388608
        %v1266 = vsub.s32 0, %v1265
        %v1267 = vadd.s32 %v1262, 1
        %vm1268 = vcmp.gt.s32.totalorder %v1267, 0
        %v1269 = vsel %vm1268, %v1267, 0
        %v1270 = vshrl.u32 %v1269, 5
        %v1271 = vand.u32 %v1269, 31
        %v1272 = vsub.s32 32, %v1271
        %v1273 = vshrl.u32 683565275, %v1272
        %v1274 = vshll.u32 683565275, %v1271
        %v1275 = vshrl.u32 2475754826, %v1272
        %v1276 = vor.u32 %v1274, %v1275
        %v1277 = vshll.u32 2475754826, %v1271
        %v1278 = vshrl.u32 2131351028, %v1272
        %v1279 = vor.u32 %v1277, %v1278
        %v1280 = vshll.u32 2131351028, %v1271
        %v1281 = vshrl.u32 2102212464, %v1272
        %v1282 = vor.u32 %v1280, %v1281
        %v1283 = vshll.u32 2102212464, %v1271
        %v1284 = vshrl.u32 920167782, %v1272
        %v1285 = vor.u32 %v1283, %v1284
        %v1286 = vshll.u32 920167782, %v1271
        %v1287 = vshrl.u32 1326507024, %v1272
        %v1288 = vor.u32 %v1286, %v1287
        %vm1289 = vcmp.lt.s32.totalorder %v1270, 1
        %vm1290 = vcmp.lt.s32.totalorder %v1270, 2
        %vm1291 = vcmp.lt.s32.totalorder %v1270, 3
        %vm1292 = vcmp.lt.s32.totalorder %v1270, 4
        %v1293 = vsel %vm1289, %v1273, %v1276
        %v1294 = vsel %vm1292, %v1282, 2102212464
        %v1295 = vsel %vm1291, %v1279, %v1294
        %v1296 = vsel %vm1290, %v1293, %v1295
        %v1297 = vsel %vm1289, %v1276, %v1279
        %v1298 = vsel %vm1292, %v1285, 920167782
        %v1299 = vsel %vm1291, %v1282, %v1298
        %v1300 = vsel %vm1290, %v1297, %v1299
        %v1301 = vsel %vm1289, %v1279, %v1282
        %v1302 = vsel %vm1292, %v1288, 1326507024
        %v1303 = vsel %vm1291, %v1285, %v1302
        %v1304 = vsel %vm1290, %v1301, %v1303
        %v1305 = vshll.u32 %v1265, 8
        %v1306 = vand.u32 %v1305, 65535
        %v1307 = vshrl.u32 %v1305, 16
        %v1308 = vand.u32 %v1304, 65535
        %v1309 = vshrl.u32 %v1304, 16
        %v1310 = vmul.u32 %v1306, %v1308
        %v1311 = vmul.u32 %v1306, %v1309
        %v1312 = vmul.u32 %v1307, %v1308
        %v1313 = vmul.u32 %v1307, %v1309
        %v1314 = vshll.u32 %v1311, 16
        %v1315 = vshrl.u32 %v1311, 16
        %v1316 = vshll.u32 %v1312, 16
        %v1317 = vshrl.u32 %v1312, 16
        %vm1318 = vc.u32 %v1310, %v1314
        %v1319 = vsel %vm1318, 1, 0
        %v1320 = vadd.s32 %v1310, %v1314
        %v1321 = vadd.s32 %v1313, %v1319
        %vm1322 = vc.u32 %v1320, %v1316
        %v1323 = vsel %vm1322, 1, 0
        %v1324 = vadd.s32 %v1320, %v1316
        %v1325 = vadd.s32 %v1321, %v1323
        %v1326 = vadd.s32 %v1325, %v1315
        %v1327 = vadd.s32 %v1326, %v1317
        %v1328 = vand.u32 %v1305, 65535
        %v1329 = vshrl.u32 %v1305, 16
        %v1330 = vand.u32 %v1300, 65535
        %v1331 = vshrl.u32 %v1300, 16
        %v1332 = vmul.u32 %v1328, %v1330
        %v1333 = vmul.u32 %v1328, %v1331
        %v1334 = vmul.u32 %v1329, %v1330
        %v1335 = vmul.u32 %v1329, %v1331
        %v1336 = vshll.u32 %v1333, 16
        %v1337 = vshrl.u32 %v1333, 16
        %v1338 = vshll.u32 %v1334, 16
        %v1339 = vshrl.u32 %v1334, 16
        %vm1340 = vc.u32 %v1332, %v1336
        %v1341 = vsel %vm1340, 1, 0
        %v1342 = vadd.s32 %v1332, %v1336
        %v1343 = vadd.s32 %v1335, %v1341
        %vm1344 = vc.u32 %v1342, %v1338
        %v1345 = vsel %vm1344, 1, 0
        %v1346 = vadd.s32 %v1342, %v1338
        %v1347 = vadd.s32 %v1343, %v1345
        %v1348 = vadd.s32 %v1347, %v1337
        %v1349 = vadd.s32 %v1348, %v1339
        %v1350 = vmul.u32 %v1305, %v1296
        %v1351 = vadd.s32 %v1327, %v1346
        %vm1352 = vc.u32 %v1327, %v1346
        %v1353 = vadd.s32 %v1349, 1
        %v1354 = vsel %vm1352, %v1353, %v1349
        %v1355 = vadd.s32 %v1350, %v1354
        %v1356 = vadd.s32 %v1355, 536870912
        %v1357 = vshrl.u32 %v1356, 30
        %v1358 = vshll.u32 %v1357, 30
        %v1359 = vsub.s32 %v1355, %v1358
        %vm1360 = vcmp.lt.s32.totalorder %v1359, 0
        %v1361 = vsub.s32 0, %v1359
        %v1362 = vsel %vm1360, %v1361, %v1359
        %v1363 = vclz %v1362
        %v1364 = vsub.s32 %v1363, 2
        %vm1365 = vcmp.gt.s32.totalorder 0, %v1364
        %v1366 = vsel %vm1365, 0, %v1364
        %v1367 = vsub.s32 32, %v1366
        %v1368 = vshll.u32 %v1359, %v1366
        %v1369 = vshrl.u32 %v1351, %v1367
        %v1370 = vor.u32 %v1368, %v1369
        %v1371 = vsub.s32 4294967266, %v1366
        %v1372 = vadd.s32 %v1371, 127
        %v1373 = vshll.u32 %v1372, 23
        %v1374 = vor.u32 4788187, %v1373
        %v1375 = vand.u32 2147483647, %v1374
        %v1377 = vcvt.s32.f32 %v1370
        %v1378 = vmul.f32 %v1377, %v1375
        %v1379 = vxor.u32 %v1378, 2147483648
        %v1380 = vsel %vm1259, %v1379, %v1378
        %v1381 = vsub.s32 4, %v1357
        %v1382 = vsel %vm1259, %v1381, %v1357
        %v1383 = vsel %vm1258, %v1094, %v1380
        %v1384 = vsel %vm1258, 0, %v1382
        %v1385 = vmul.f32 %v1383, %v1383
        %v1386 = vmul.f32 %v1385, -0.001358992
        %v1387 = vadd.f32 %v1386, 0.041655596
        %v1388 = vmul.f32 %v1385, %v1387
        %v1389 = vadd.f32 %v1388, -0.4999988
        %v1390 = vmul.f32 %v1385, %v1389
        %v1391 = vadd.f32 1.0, %v1390
        %v1392 = vmul.f32 %v1383, %v1383
        %v1393 = vmul.f32 %v1392, -0.00019511016
        %v1394 = vadd.f32 %v1393, 0.008332121
        %v1395 = vmul.f32 %v1392, %v1394
        %v1396 = vadd.f32 %v1395, -0.16666654
        %v1397 = vmul.f32 %v1392, %v1396
        %v1398 = vadd.f32 %v1397, 1.0
        %v1399 = vmul.f32 %v1398, %v1383
        %vm1400 = vweird.f32 %v1094
        %v1401 = vadd.s32 %v1384, 3
        %v1402 = vand.u32 %v1401, 3
        %vm1403 = vcmp.lt.s32.totalorder %v1402, 2
        %vm1404 = vcmp.eq.s32.totalorder %v1402, 0
        %v1405 = vxor.u32 %v1399, 2147483648
        %v1406 = vsel %vm1404, %v1391, %v1405
        %vm1407 = vcmp.eq.s32.totalorder %v1402, 2
        %v1408 = vxor.u32 %v1391, 2147483648
        %v1409 = vsel %vm1407, %v1408, %v1399
        %v1410 = vsel %vm1403, %v1406, %v1409
        %v1411 = vsel %vm1400, nan, %v1410
        %v1412 = vand.u32 2147483647, %v1097
        %vm1413 = vcmp.le.f32.partialorder %v1412, 0.7853982
        %vm1414 = vcmp.lt.s32.totalorder %v1097, 0
        %v1415 = vand.u32 %v1097, 2139095040
        %v1416 = vshrl.u32 %v1415, 23
        %v1417 = vsub.s32 %v1416, 127
        %v1418 = vand.u32 2147483647, %v1097
        %v1419 = vand.u32 %v1418, 8388607
        %v1420 = vor.u32 %v1419, 8388608
        %v1421 = vsub.s32 0, %v1420
        %v1422 = vadd.s32 %v1417, 1
        %vm1423 = vcmp.gt.s32.totalorder %v1422, 0
        %v1424 = vsel %vm1423, %v1422, 0
        %v1425 = vshrl.u32 %v1424, 5
        %v1426 = vand.u32 %v1424, 31
        %v1427 = vsub.s32 32, %v1426
        %v1428 = vshrl.u32 683565275, %v1427
        %v1429 = vshll.u32 683565275, %v1426
        %v1430 = vshrl.u32 2475754826, %v1427
        %v1431 = vor.u32 %v1429, %v1430
        %v1432 = vshll.u32 2475754826, %v1426
        %v1433 = vshrl.u32 2131351028, %v1427
        %v1434 = vor.u32 %v1432, %v1433
        %v1435 = vshll.u32 2131351028, %v1426
        %v1436 = vshrl.u32 2102212464, %v1427
        %v1437 = vor.u32 %v1435, %v1436
        %v1438 = vshll.u32 2102212464, %v1426
        %v1439 = vshrl.u32 920167782, %v1427
        %v1440 = vor.u32 %v1438, %v1439
        %v1441 = vshll.u32 920167782, %v1426
        %v1442 = vshrl.u32 1326507024, %v1427
        %v1443 = vor.u32 %v1441, %v1442
        %vm1444 = vcmp.lt.s32.totalorder %v1425, 1
        %vm1445 = vcmp.lt.s32.totalorder %v1425, 2
        %vm1446 = vcmp.lt.s32.totalorder %v1425, 3
        %vm1447 = vcmp.lt.s32.totalorder %v1425, 4
        %v1448 = vsel %vm1444, %v1428, %v1431
        %v1449 = vsel %vm1447, %v1437, 2102212464
        %v1450 = vsel %vm1446, %v1434, %v1449
        %v1451 = vsel %vm1445, %v1448, %v1450
        %v1452 = vsel %vm1444, %v1431, %v1434
        %v1453 = vsel %vm1447, %v1440, 920167782
        %v1454 = vsel %vm1446, %v1437, %v1453
        %v1455 = vsel %vm1445, %v1452, %v1454
        %v1456 = vsel %vm1444, %v1434, %v1437
        %v1457 = vsel %vm1447, %v1443, 1326507024
        %v1458 = vsel %vm1446, %v1440, %v1457
        %v1459 = vsel %vm1445, %v1456, %v1458
        %v1460 = vshll.u32 %v1420, 8
        %v1461 = vand.u32 %v1460, 65535
        %v1462 = vshrl.u32 %v1460, 16
        %v1463 = vand.u32 %v1459, 65535
        %v1464 = vshrl.u32 %v1459, 16
        %v1465 = vmul.u32 %v1461, %v1463
        %v1466 = vmul.u32 %v1461, %v1464
        %v1467 = vmul.u32 %v1462, %v1463
        %v1468 = vmul.u32 %v1462, %v1464
        %v1469 = vshll.u32 %v1466, 16
        %v1470 = vshrl.u32 %v1466, 16
        %v1471 = vshll.u32 %v1467, 16
        %v1472 = vshrl.u32 %v1467, 16
        %vm1473 = vc.u32 %v1465, %v1469
        %v1474 = vsel %vm1473, 1, 0
        %v1475 = vadd.s32 %v1465, %v1469
        %v1476 = vadd.s32 %v1468, %v1474
        %vm1477 = vc.u32 %v1475, %v1471
        %v1478 = vsel %vm1477, 1, 0
        %v1479 = vadd.s32 %v1475, %v1471
        %v1480 = vadd.s32 %v1476, %v1478
        %v1481 = vadd.s32 %v1480, %v1470
        %v1482 = vadd.s32 %v1481, %v1472
        %v1483 = vand.u32 %v1460, 65535
        %v1484 = vshrl.u32 %v1460, 16
        %v1485 = vand.u32 %v1455, 65535
        %v1486 = vshrl.u32 %v1455, 16
        %v1487 = vmul.u32 %v1483, %v1485
        %v1488 = vmul.u32 %v1483, %v1486
        %v1489 = vmul.u32 %v1484, %v1485
        %v1490 = vmul.u32 %v1484, %v1486
        %v1491 = vshll.u32 %v1488, 16
        %v1492 = vshrl.u32 %v1488, 16
        %v1493 = vshll.u32 %v1489, 16
        %v1494 = vshrl.u32 %v1489, 16
        %vm1495 = vc.u32 %v1487, %v1491
        %v1496 = vsel %vm1495, 1, 0
        %v1497 = vadd.s32 %v1487, %v1491
        %v1498 = vadd.s32 %v1490, %v1496
        %vm1499 = vc.u32 %v1497, %v1493
        %v1500 = vsel %vm1499, 1, 0
        %v1501 = vadd.s32 %v1497, %v1493
        %v1502 = vadd.s32 %v1498, %v1500
        %v1503 = vadd.s32 %v1502, %v1492
        %v1504 = vadd.s32 %v1503, %v1494
        %v1505 = vmul.u32 %v1460, %v1451
        %v1506 = vadd.s32 %v1482, %v1501
        %vm1507 = vc.u32 %v1482, %v1501
        %v1508 = vadd.s32 %v1504, 1
        %v1509 = vsel %vm1507, %v1508, %v1504
        %v1510 = vadd.s32 %v1505, %v1509
        %v1511 = vadd.s32 %v1510, 536870912
        %v1512 = vshrl.u32 %v1511, 30
        %v1513 = vshll.u32 %v1512, 30
        %v1514 = vsub.s32 %v1510, %v1513
        %vm1515 = vcmp.lt.s32.totalorder %v1514, 0
        %v1516 = vsub.s32 0, %v1514
        %v1517 = vsel %vm1515, %v1516, %v1514
        %v1518 = vclz %v1517
        %v1519 = vsub.s32 %v1518, 2
        %vm1520 = vcmp.gt.s32.totalorder 0, %v1519
        %v1521 = vsel %vm1520, 0, %v1519
        %v1522 = vsub.s32 32, %v1521
        %v1523 = vshll.u32 %v1514, %v1521
        %v1524 = vshrl.u32 %v1506, %v1522
        %v1525 = vor.u32 %v1523, %v1524
        %v1526 = vsub.s32 4294967266, %v1521
        %v1527 = vadd.s32 %v1526, 127
        %v1528 = vshll.u32 %v1527, 23
        %v1529 = vor.u32 4788187, %v1528
        %v1530 = vand.u32 2147483647, %v1529
        %v1532 = vcvt.s32.f32 %v1525
        %v1533 = vmul.f32 %v1532, %v1530
        %v1534 = vxor.u32 %v1533, 2147483648
        %v1535 = vsel %vm1414, %v1534, %v1533
        %v1536 = vsub.s32 4, %v1512
        %v1537 = vsel %vm1414, %v1536, %v1512
        %v1538 = vsel %vm1413, %v1097, %v1535
        %v1539 = vsel %vm1413, 0, %v1537
        %v1540 = vmul.f32 %v1538, %v1538
        %v1541 = vmul.f32 %v1540, -0.001358992
        %v1542 = vadd.f32 %v1541, 0.041655596
        %v1543 = vmul.f32 %v1540, %v1542
        %v1544 = vadd.f32 %v1543, -0.4999988
        %v1545 = vmul.f32 %v1540, %v1544
        %v1546 = vadd.f32 1.0, %v1545
        %v1547 = vmul.f32 %v1538, %v1538
        %v1548 = vmul.f32 %v1547, -0.00019511016
        %v1549 = vadd.f32 %v1548, 0.008332121
        %v1550 = vmul.f32 %v1547, %v1549
        %v1551 = vadd.f32 %v1550, -0.16666654
        %v1552 = vmul.f32 %v1547, %v1551
        %v1553 = vadd.f32 %v1552, 1.0
        %v1554 = vmul.f32 %v1553, %v1538
        %vm1555 = vweird.f32 %v1097
        %v1556 = vadd.s32 %v1539, 3
        %v1557 = vand.u32 %v1556, 3
        %vm1558 = vcmp.lt.s32.totalorder %v1557, 2
        %vm1559 = vcmp.eq.s32.totalorder %v1557, 0
        %v1560 = vxor.u32 %v1554, 2147483648
        %v1561 = vsel %vm1559, %v1546, %v1560
        %vm1562 = vcmp.eq.s32.totalorder %v1557, 2
        %v1563 = vxor.u32 %v1546, 2147483648
        %v1564 = vsel %vm1562, %v1563, %v1554
        %v1565 = vsel %vm1558, %v1561, %v1564
        %v1566 = vsel %vm1555, nan, %v1565
        %v1567 = vand.u32 2147483647, %v1100
        %vm1568 = vcmp.le.f32.partialorder %v1567, 0.7853982
        %vm1569 = vcmp.lt.s32.totalorder %v1100, 0
        %v1570 = vand.u32 %v1100, 2139095040
        %v1571 = vshrl.u32 %v1570, 23
        %v1572 = vsub.s32 %v1571, 127
        %v1573 = vand.u32 2147483647, %v1100
        %v1574 = vand.u32 %v1573, 8388607
        %v1575 = vor.u32 %v1574, 8388608
        %v1576 = vsub.s32 0, %v1575
        %v1577 = vadd.s32 %v1572, 1
        %vm1578 = vcmp.gt.s32.totalorder %v1577, 0
        %v1579 = vsel %vm1578, %v1577, 0
        %v1580 = vshrl.u32 %v1579, 5
        %v1581 = vand.u32 %v1579, 31
        %v1582 = vsub.s32 32, %v1581
        %v1583 = vshrl.u32 683565275, %v1582
        %v1584 = vshll.u32 683565275, %v1581
        %v1585 = vshrl.u32 2475754826, %v1582
        %v1586 = vor.u32 %v1584, %v1585
        %v1587 = vshll.u32 2475754826, %v1581
        %v1588 = vshrl.u32 2131351028, %v1582
        %v1589 = vor.u32 %v1587, %v1588
        %v1590 = vshll.u32 2131351028, %v1581
        %v1591 = vshrl.u32 2102212464, %v1582
        %v1592 = vor.u32 %v1590, %v1591
        %v1593 = vshll.u32 2102212464, %v1581
        %v1594 = vshrl.u32 920167782, %v1582
        %v1595 = vor.u32 %v1593, %v1594
        %v1596 = vshll.u32 920167782, %v1581
        %v1597 = vshrl.u32 1326507024, %v1582
        %v1598 = vor.u32 %v1596, %v1597
        %vm1599 = vcmp.lt.s32.totalorder %v1580, 1
        %vm1600 = vcmp.lt.s32.totalorder %v1580, 2
        %vm1601 = vcmp.lt.s32.totalorder %v1580, 3
        %vm1602 = vcmp.lt.s32.totalorder %v1580, 4
        %v1603 = vsel %vm1599, %v1583, %v1586
        %v1604 = vsel %vm1602, %v1592, 2102212464
        %v1605 = vsel %vm1601, %v1589, %v1604
        %v1606 = vsel %vm1600, %v1603, %v1605
        %v1607 = vsel %vm1599, %v1586, %v1589
        %v1608 = vsel %vm1602, %v1595, 920167782
        %v1609 = vsel %vm1601, %v1592, %v1608
        %v1610 = vsel %vm1600, %v1607, %v1609
        %v1611 = vsel %vm1599, %v1589, %v1592
        %v1612 = vsel %vm1602, %v1598, 1326507024
        %v1613 = vsel %vm1601, %v1595, %v1612
        %v1614 = vsel %vm1600, %v1611, %v1613
        %v1615 = vshll.u32 %v1575, 8
        %v1616 = vand.u32 %v1615, 65535
        %v1617 = vshrl.u32 %v1615, 16
        %v1618 = vand.u32 %v1614, 65535
        %v1619 = vshrl.u32 %v1614, 16
        %v1620 = vmul.u32 %v1616, %v1618
        %v1621 = vmul.u32 %v1616, %v1619
        %v1622 = vmul.u32 %v1617, %v1618
        %v1623 = vmul.u32 %v1617, %v1619
        %v1624 = vshll.u32 %v1621, 16
        %v1625 = vshrl.u32 %v1621, 16
        %v1626 = vshll.u32 %v1622, 16
        %v1627 = vshrl.u32 %v1622, 16
        %vm1628 = vc.u32 %v1620, %v1624
        %v1629 = vsel %vm1628, 1, 0
        %v1630 = vadd.s32 %v1620, %v1624
        %v1631 = vadd.s32 %v1623, %v1629
        %vm1632 = vc.u32 %v1630, %v1626
        %v1633 = vsel %vm1632, 1, 0
        %v1634 = vadd.s32 %v1630, %v1626
        %v1635 = vadd.s32 %v1631, %v1633
        %v1636 = vadd.s32 %v1635, %v1625
        %v1637 = vadd.s32 %v1636, %v1627
        %v1638 = vand.u32 %v1615, 65535
        %v1639 = vshrl.u32 %v1615, 16
        %v1640 = vand.u32 %v1610, 65535
        %v1641 = vshrl.u32 %v1610, 16
        %v1642 = vmul.u32 %v1638, %v1640
        %v1643 = vmul.u32 %v1638, %v1641
        %v1644 = vmul.u32 %v1639, %v1640
        %v1645 = vmul.u32 %v1639, %v1641
        %v1646 = vshll.u32 %v1643, 16
        %v1647 = vshrl.u32 %v1643, 16
        %v1648 = vshll.u32 %v1644, 16
        %v1649 = vshrl.u32 %v1644, 16
        %vm1650 = vc.u32 %v1642, %v1646
        %v1651 = vsel %vm1650, 1, 0
        %v1652 = vadd.s32 %v1642, %v1646
        %v1653 = vadd.s32 %v1645, %v1651
        %vm1654 = vc.u32 %v1652, %v1648
        %v1655 = vsel %vm1654, 1, 0
        %v1656 = vadd.s32 %v1652, %v1648
        %v1657 = vadd.s32 %v1653, %v1655
        %v1658 = vadd.s32 %v1657, %v1647
        %v1659 = vadd.s32 %v1658, %v1649
        %v1660 = vmul.u32 %v1615, %v1606
        %v1661 = vadd.s32 %v1637, %v1656
        %vm1662 = vc.u32 %v1637, %v1656
        %v1663 = vadd.s32 %v1659, 1
        %v1664 = vsel %vm1662, %v1663, %v1659
        %v1665 = vadd.s32 %v1660, %v1664
        %v1666 = vadd.s32 %v1665, 536870912
        %v1667 = vshrl.u32 %v1666, 30
        %v1668 = vshll.u32 %v1667, 30
        %v1669 = vsub.s32 %v1665, %v1668
        %vm1670 = vcmp.lt.s32.totalorder %v1669, 0
        %v1671 = vsub.s32 0, %v1669
        %v1672 = vsel %vm1670, %v1671, %v1669
        %v1673 = vclz %v1672
        %v1674 = vsub.s32 %v1673, 2
        %vm1675 = vcmp.gt.s32.totalorder 0, %v1674
        %v1676 = vsel %vm1675, 0, %v1674
        %v1677 = vsub.s32 32, %v1676
        %v1678 = vshll.u32 %v1669, %v1676
        %v1679 = vshrl.u32 %v1661, %v1677
        %v1680 = vor.u32 %v1678, %v1679
        %v1681 = vsub.s32 4294967266, %v1676
        %v1682 = vadd.s32 %v1681, 127
        %v1683 = vshll.u32 %v1682, 23
        %v1684 = vor.u32 4788187, %v1683
        %v1685 = vand.u32 2147483647, %v1684
        %v1687 = vcvt.s32.f32 %v1680
        %v1688 = vmul.f32 %v1687, %v1685
        %v1689 = vxor.u32 %v1688, 2147483648
        %v1690 = vsel %vm1569, %v1689, %v1688
        %v1691 = vsub.s32 4, %v1667
        %v1692 = vsel %vm1569, %v1691, %v1667
        %v1693 = vsel %vm1568, %v1100, %v1690
        %v1694 = vsel %vm1568, 0, %v1692
        %v1695 = vmul.f32 %v1693, %v1693
        %v1696 = vmul.f32 %v1695, -0.001358992
        %v1697 = vadd.f32 %v1696, 0.041655596
        %v1698 = vmul.f32 %v1695, %v1697
        %v1699 = vadd.f32 %v1698, -0.4999988
        %v1700 = vmul.f32 %v1695, %v1699
        %v1701 = vadd.f32 1.0, %v1700
        %v1702 = vmul.f32 %v1693, %v1693
        %v1703 = vmul.f32 %v1702, -0.00019511016
        %v1704 = vadd.f32 %v1703, 0.008332121
        %v1705 = vmul.f32 %v1702, %v1704
        %v1706 = vadd.f32 %v1705, -0.16666654
        %v1707 = vmul.f32 %v1702, %v1706
        %v1708 = vadd.f32 %v1707, 1.0
        %v1709 = vmul.f32 %v1708, %v1693
        %vm1710 = vweird.f32 %v1100
        %v1711 = vadd.s32 %v1694, 3
        %v1712 = vand.u32 %v1711, 3
        %vm1713 = vcmp.lt.s32.totalorder %v1712, 2
        %vm1714 = vcmp.eq.s32.totalorder %v1712, 0
        %v1715 = vxor.u32 %v1709, 2147483648
        %v1716 = vsel %vm1714, %v1701, %v1715
        %vm1717 = vcmp.eq.s32.totalorder %v1712, 2
        %v1718 = vxor.u32 %v1701, 2147483648
        %v1719 = vsel %vm1717, %v1718, %v1709
        %v1720 = vsel %vm1713, %v1716, %v1719
        %v1721 = vsel %vm1710, nan, %v1720
        %v1722 = vld [vmem:[%s5] sm:$0xff]
        %v1723 = vld [vmem:[%s5 + $0x8] sm:$0xff]
        %v1724 = vld [vmem:[%s5 + $0x10] sm:$0xff]
        %v1725 = vld [vmem:[%s5 + $0x18] sm:$0xff]
        %v1726 = vld [vmem:[%s6] sm:$0xff]
        %v1727 = vld [vmem:[%s6 + $0x8] sm:$0xff]
        %v1728 = vld [vmem:[%s6 + $0x10] sm:$0xff]
        %v1729 = vld [vmem:[%s6 + $0x18] sm:$0xff]
        %1731 = vset.pattern.permute.xlu0 0
        %1732 = vperm.xlu0 %1731, %v1726
        %v1733 = vpop.permute.xlu0 %1732
        %1736 = vset.pattern.permute.xlu0 0
        %1737 = vperm.xlu0 %1736, %v1727
        %v1738 = vpop.permute.xlu0 %1737
        %1741 = vset.pattern.permute.xlu0 0
        %1742 = vperm.xlu0 %1741, %v1728
        %v1743 = vpop.permute.xlu0 %1742
        %1746 = vset.pattern.permute.xlu0 0
        %1747 = vperm.xlu0 %1746, %v1729
        %v1748 = vpop.permute.xlu0 %1747
        %v1751 = vsel %vm1060, %v1722, 0
        %v1754 = vsel %vm1060, %v1723, 0
        %v1757 = vsel %vm1060, %v1724, 0
        %v1760 = vsel %vm1060, %v1725, 0
        %1762 = vmatpush.msra.mxu0 0.0
        %1763 = vmatpush.msra.mxu0 0.0
        %1764 = vmatpush.msra.mxu0 0.0
        %1765 = vmatpush.msra.mxu0 0.0
        %1766 = vmatpush.msra.mxu0 0.0
        %1767 = vmatpush.msra.mxu0 0.0
        %1768 = vmatpush.msra.mxu0 0.0
        %1769 = vmatpush.msra.mxu0 0.0
        %1770 = vmatpush.msra.mxu0 0.0
        %1771 = vmatpush.msra.mxu0 0.0
        %1772 = vmatpush.msra.mxu0 0.0
        %1773 = vmatpush.msra.mxu0 0.0
        %1774 = vmatpush.msra.mxu0 %v1721
        %1775 = vmatpush.msra.mxu0 %v1566
        %1776 = vmatpush.msra.mxu0 %v1411
        %1777 = vmatpush.msra.mxu0 %v1256
        %1778 = vmatmul.f32.gmra.mxu0 %v1751
        %v1779 = vpop.f32.mrf.mxu0
        %v1780 = vadd.f32 %v1733, %v1779
        %1781 = vmatmul.f32.gmra.mxu0 %v1754
        %v1782 = vpop.f32.mrf.mxu0
        %v1783 = vadd.f32 %v1738, %v1782
        %1784 = vmatmul.f32.gmra.mxu0 %v1757
        %v1785 = vpop.f32.mrf.mxu0
        %v1786 = vadd.f32 %v1743, %v1785
        %1787 = vmatmul.f32.gmra.mxu0 %v1760
        %v1788 = vpop.f32.mrf.mxu0
        %v1789 = vadd.f32 %v1748, %v1788
        %1790 = vdwg.mxu0
        %v1791 = vand.u32 2147483647, %v1780
        %vm1792 = vcmp.le.f32.partialorder %v1791, 0.7853982
        %vm1793 = vcmp.lt.s32.totalorder %v1780, 0
        %v1794 = vand.u32 %v1780, 2139095040
        %v1795 = vshrl.u32 %v1794, 23
        %v1796 = vsub.s32 %v1795, 127
        %v1797 = vand.u32 2147483647, %v1780
        %v1798 = vand.u32 %v1797, 8388607
        %v1799 = vor.u32 %v1798, 8388608
        %v1800 = vsub.s32 0, %v1799
        %v1801 = vadd.s32 %v1796, 1
        %vm1802 = vcmp.gt.s32.totalorder %v1801, 0
        %v1803 = vsel %vm1802, %v1801, 0
        %v1804 = vshrl.u32 %v1803, 5
        %v1805 = vand.u32 %v1803, 31
        %v1806 = vsub.s32 32, %v1805
        %v1807 = vshrl.u32 683565275, %v1806
        %v1808 = vshll.u32 683565275, %v1805
        %v1809 = vshrl.u32 2475754826, %v1806
        %v1810 = vor.u32 %v1808, %v1809
        %v1811 = vshll.u32 2475754826, %v1805
        %v1812 = vshrl.u32 2131351028, %v1806
        %v1813 = vor.u32 %v1811, %v1812
        %v1814 = vshll.u32 2131351028, %v1805
        %v1815 = vshrl.u32 2102212464, %v1806
        %v1816 = vor.u32 %v1814, %v1815
        %v1817 = vshll.u32 2102212464, %v1805
        %v1818 = vshrl.u32 920167782, %v1806
        %v1819 = vor.u32 %v1817, %v1818
        %v1820 = vshll.u32 920167782, %v1805
        %v1821 = vshrl.u32 1326507024, %v1806
        %v1822 = vor.u32 %v1820, %v1821
        %vm1823 = vcmp.lt.s32.totalorder %v1804, 1
        %vm1824 = vcmp.lt.s32.totalorder %v1804, 2
        %vm1825 = vcmp.lt.s32.totalorder %v1804, 3
        %vm1826 = vcmp.lt.s32.totalorder %v1804, 4
        %v1827 = vsel %vm1823, %v1807, %v1810
        %v1828 = vsel %vm1826, %v1816, 2102212464
        %v1829 = vsel %vm1825, %v1813, %v1828
        %v1830 = vsel %vm1824, %v1827, %v1829
        %v1831 = vsel %vm1823, %v1810, %v1813
        %v1832 = vsel %vm1826, %v1819, 920167782
        %v1833 = vsel %vm1825, %v1816, %v1832
        %v1834 = vsel %vm1824, %v1831, %v1833
        %v1835 = vsel %vm1823, %v1813, %v1816
        %v1836 = vsel %vm1826, %v1822, 1326507024
        %v1837 = vsel %vm1825, %v1819, %v1836
        %v1838 = vsel %vm1824, %v1835, %v1837
        %v1839 = vshll.u32 %v1799, 8
        %v1840 = vand.u32 %v1839, 65535
        %v1841 = vshrl.u32 %v1839, 16
        %v1842 = vand.u32 %v1838, 65535
        %v1843 = vshrl.u32 %v1838, 16
        %v1844 = vmul.u32 %v1840, %v1842
        %v1845 = vmul.u32 %v1840, %v1843
        %v1846 = vmul.u32 %v1841, %v1842
        %v1847 = vmul.u32 %v1841, %v1843
        %v1848 = vshll.u32 %v1845, 16
        %v1849 = vshrl.u32 %v1845, 16
        %v1850 = vshll.u32 %v1846, 16
        %v1851 = vshrl.u32 %v1846, 16
        %vm1852 = vc.u32 %v1844, %v1848
        %v1853 = vsel %vm1852, 1, 0
        %v1854 = vadd.s32 %v1844, %v1848
        %v1855 = vadd.s32 %v1847, %v1853
        %vm1856 = vc.u32 %v1854, %v1850
        %v1857 = vsel %vm1856, 1, 0
        %v1858 = vadd.s32 %v1854, %v1850
        %v1859 = vadd.s32 %v1855, %v1857
        %v1860 = vadd.s32 %v1859, %v1849
        %v1861 = vadd.s32 %v1860, %v1851
        %v1862 = vand.u32 %v1839, 65535
        %v1863 = vshrl.u32 %v1839, 16
        %v1864 = vand.u32 %v1834, 65535
        %v1865 = vshrl.u32 %v1834, 16
        %v1866 = vmul.u32 %v1862, %v1864
        %v1867 = vmul.u32 %v1862, %v1865
        %v1868 = vmul.u32 %v1863, %v1864
        %v1869 = vmul.u32 %v1863, %v1865
        %v1870 = vshll.u32 %v1867, 16
        %v1871 = vshrl.u32 %v1867, 16
        %v1872 = vshll.u32 %v1868, 16
        %v1873 = vshrl.u32 %v1868, 16
        %vm1874 = vc.u32 %v1866, %v1870
        %v1875 = vsel %vm1874, 1, 0
        %v1876 = vadd.s32 %v1866, %v1870
        %v1877 = vadd.s32 %v1869, %v1875
        %vm1878 = vc.u32 %v1876, %v1872
        %v1879 = vsel %vm1878, 1, 0
        %v1880 = vadd.s32 %v1876, %v1872
        %v1881 = vadd.s32 %v1877, %v1879
        %v1882 = vadd.s32 %v1881, %v1871
        %v1883 = vadd.s32 %v1882, %v1873
        %v1884 = vmul.u32 %v1839, %v1830
        %v1885 = vadd.s32 %v1861, %v1880
        %vm1886 = vc.u32 %v1861, %v1880
        %v1887 = vadd.s32 %v1883, 1
        %v1888 = vsel %vm1886, %v1887, %v1883
        %v1889 = vadd.s32 %v1884, %v1888
        %v1890 = vadd.s32 %v1889, 536870912
        %v1891 = vshrl.u32 %v1890, 30
        %v1892 = vshll.u32 %v1891, 30
        %v1893 = vsub.s32 %v1889, %v1892
        %vm1894 = vcmp.lt.s32.totalorder %v1893, 0
        %v1895 = vsub.s32 0, %v1893
        %v1896 = vsel %vm1894, %v1895, %v1893
        %v1897 = vclz %v1896
        %v1898 = vsub.s32 %v1897, 2
        %vm1899 = vcmp.gt.s32.totalorder 0, %v1898
        %v1900 = vsel %vm1899, 0, %v1898
        %v1901 = vsub.s32 32, %v1900
        %v1902 = vshll.u32 %v1893, %v1900
        %v1903 = vshrl.u32 %v1885, %v1901
        %v1904 = vor.u32 %v1902, %v1903
        %v1905 = vsub.s32 4294967266, %v1900
        %v1906 = vadd.s32 %v1905, 127
        %v1907 = vshll.u32 %v1906, 23
        %v1908 = vor.u32 4788187, %v1907
        %v1909 = vand.u32 2147483647, %v1908
        %v1911 = vcvt.s32.f32 %v1904
        %v1912 = vmul.f32 %v1911, %v1909
        %v1913 = vxor.u32 %v1912, 2147483648
        %v1914 = vsel %vm1793, %v1913, %v1912
        %v1915 = vsub.s32 4, %v1891
        %v1916 = vsel %vm1793, %v1915, %v1891
        %v1917 = vsel %vm1792, %v1780, %v1914
        %v1918 = vsel %vm1792, 0, %v1916
        %v1919 = vmul.f32 %v1917, %v1917
        %v1920 = vmul.f32 %v1919, -0.001358992
        %v1921 = vadd.f32 %v1920, 0.041655596
        %v1922 = vmul.f32 %v1919, %v1921
        %v1923 = vadd.f32 %v1922, -0.4999988
        %v1924 = vmul.f32 %v1919, %v1923
        %v1925 = vadd.f32 1.0, %v1924
        %v1926 = vmul.f32 %v1917, %v1917
        %v1927 = vmul.f32 %v1926, -0.00019511016
        %v1928 = vadd.f32 %v1927, 0.008332121
        %v1929 = vmul.f32 %v1926, %v1928
        %v1930 = vadd.f32 %v1929, -0.16666654
        %v1931 = vmul.f32 %v1926, %v1930
        %v1932 = vadd.f32 %v1931, 1.0
        %v1933 = vmul.f32 %v1932, %v1917
        %vm1934 = vweird.f32 %v1780
        %v1935 = vadd.s32 %v1918, 3
        %v1936 = vand.u32 %v1935, 3
        %vm1937 = vcmp.lt.s32.totalorder %v1936, 2
        %vm1938 = vcmp.eq.s32.totalorder %v1936, 0
        %v1939 = vxor.u32 %v1933, 2147483648
        %v1940 = vsel %vm1938, %v1925, %v1939
        %vm1941 = vcmp.eq.s32.totalorder %v1936, 2
        %v1942 = vxor.u32 %v1925, 2147483648
        %v1943 = vsel %vm1941, %v1942, %v1933
        %v1944 = vsel %vm1937, %v1940, %v1943
        %v1945 = vsel %vm1934, nan, %v1944
        %v1946 = vand.u32 2147483647, %v1783
        %vm1947 = vcmp.le.f32.partialorder %v1946, 0.7853982
        %vm1948 = vcmp.lt.s32.totalorder %v1783, 0
        %v1949 = vand.u32 %v1783, 2139095040
        %v1950 = vshrl.u32 %v1949, 23
        %v1951 = vsub.s32 %v1950, 127
        %v1952 = vand.u32 2147483647, %v1783
        %v1953 = vand.u32 %v1952, 8388607
        %v1954 = vor.u32 %v1953, 8388608
        %v1955 = vsub.s32 0, %v1954
        %v1956 = vadd.s32 %v1951, 1
        %vm1957 = vcmp.gt.s32.totalorder %v1956, 0
        %v1958 = vsel %vm1957, %v1956, 0
        %v1959 = vshrl.u32 %v1958, 5
        %v1960 = vand.u32 %v1958, 31
        %v1961 = vsub.s32 32, %v1960
        %v1962 = vshrl.u32 683565275, %v1961
        %v1963 = vshll.u32 683565275, %v1960
        %v1964 = vshrl.u32 2475754826, %v1961
        %v1965 = vor.u32 %v1963, %v1964
        %v1966 = vshll.u32 2475754826, %v1960
        %v1967 = vshrl.u32 2131351028, %v1961
        %v1968 = vor.u32 %v1966, %v1967
        %v1969 = vshll.u32 2131351028, %v1960
        %v1970 = vshrl.u32 2102212464, %v1961
        %v1971 = vor.u32 %v1969, %v1970
        %v1972 = vshll.u32 2102212464, %v1960
        %v1973 = vshrl.u32 920167782, %v1961
        %v1974 = vor.u32 %v1972, %v1973
        %v1975 = vshll.u32 920167782, %v1960
        %v1976 = vshrl.u32 1326507024, %v1961
        %v1977 = vor.u32 %v1975, %v1976
        %vm1978 = vcmp.lt.s32.totalorder %v1959, 1
        %vm1979 = vcmp.lt.s32.totalorder %v1959, 2
        %vm1980 = vcmp.lt.s32.totalorder %v1959, 3
        %vm1981 = vcmp.lt.s32.totalorder %v1959, 4
        %v1982 = vsel %vm1978, %v1962, %v1965
        %v1983 = vsel %vm1981, %v1971, 2102212464
        %v1984 = vsel %vm1980, %v1968, %v1983
        %v1985 = vsel %vm1979, %v1982, %v1984
        %v1986 = vsel %vm1978, %v1965, %v1968
        %v1987 = vsel %vm1981, %v1974, 920167782
        %v1988 = vsel %vm1980, %v1971, %v1987
        %v1989 = vsel %vm1979, %v1986, %v1988
        %v1990 = vsel %vm1978, %v1968, %v1971
        %v1991 = vsel %vm1981, %v1977, 1326507024
        %v1992 = vsel %vm1980, %v1974, %v1991
        %v1993 = vsel %vm1979, %v1990, %v1992
        %v1994 = vshll.u32 %v1954, 8
        %v1995 = vand.u32 %v1994, 65535
        %v1996 = vshrl.u32 %v1994, 16
        %v1997 = vand.u32 %v1993, 65535
        %v1998 = vshrl.u32 %v1993, 16
        %v1999 = vmul.u32 %v1995, %v1997
        %v2000 = vmul.u32 %v1995, %v1998
        %v2001 = vmul.u32 %v1996, %v1997
        %v2002 = vmul.u32 %v1996, %v1998
        %v2003 = vshll.u32 %v2000, 16
        %v2004 = vshrl.u32 %v2000, 16
        %v2005 = vshll.u32 %v2001, 16
        %v2006 = vshrl.u32 %v2001, 16
        %vm2007 = vc.u32 %v1999, %v2003
        %v2008 = vsel %vm2007, 1, 0
        %v2009 = vadd.s32 %v1999, %v2003
        %v2010 = vadd.s32 %v2002, %v2008
        %vm2011 = vc.u32 %v2009, %v2005
        %v2012 = vsel %vm2011, 1, 0
        %v2013 = vadd.s32 %v2009, %v2005
        %v2014 = vadd.s32 %v2010, %v2012
        %v2015 = vadd.s32 %v2014, %v2004
        %v2016 = vadd.s32 %v2015, %v2006
        %v2017 = vand.u32 %v1994, 65535
        %v2018 = vshrl.u32 %v1994, 16
        %v2019 = vand.u32 %v1989, 65535
        %v2020 = vshrl.u32 %v1989, 16
        %v2021 = vmul.u32 %v2017, %v2019
        %v2022 = vmul.u32 %v2017, %v2020
        %v2023 = vmul.u32 %v2018, %v2019
        %v2024 = vmul.u32 %v2018, %v2020
        %v2025 = vshll.u32 %v2022, 16
        %v2026 = vshrl.u32 %v2022, 16
        %v2027 = vshll.u32 %v2023, 16
        %v2028 = vshrl.u32 %v2023, 16
        %vm2029 = vc.u32 %v2021, %v2025
        %v2030 = vsel %vm2029, 1, 0
        %v2031 = vadd.s32 %v2021, %v2025
        %v2032 = vadd.s32 %v2024, %v2030
        %vm2033 = vc.u32 %v2031, %v2027
        %v2034 = vsel %vm2033, 1, 0
        %v2035 = vadd.s32 %v2031, %v2027
        %v2036 = vadd.s32 %v2032, %v2034
        %v2037 = vadd.s32 %v2036, %v2026
        %v2038 = vadd.s32 %v2037, %v2028
        %v2039 = vmul.u32 %v1994, %v1985
        %v2040 = vadd.s32 %v2016, %v2035
        %vm2041 = vc.u32 %v2016, %v2035
        %v2042 = vadd.s32 %v2038, 1
        %v2043 = vsel %vm2041, %v2042, %v2038
        %v2044 = vadd.s32 %v2039, %v2043
        %v2045 = vadd.s32 %v2044, 536870912
        %v2046 = vshrl.u32 %v2045, 30
        %v2047 = vshll.u32 %v2046, 30
        %v2048 = vsub.s32 %v2044, %v2047
        %vm2049 = vcmp.lt.s32.totalorder %v2048, 0
        %v2050 = vsub.s32 0, %v2048
        %v2051 = vsel %vm2049, %v2050, %v2048
        %v2052 = vclz %v2051
        %v2053 = vsub.s32 %v2052, 2
        %vm2054 = vcmp.gt.s32.totalorder 0, %v2053
        %v2055 = vsel %vm2054, 0, %v2053
        %v2056 = vsub.s32 32, %v2055
        %v2057 = vshll.u32 %v2048, %v2055
        %v2058 = vshrl.u32 %v2040, %v2056
        %v2059 = vor.u32 %v2057, %v2058
        %v2060 = vsub.s32 4294967266, %v2055
        %v2061 = vadd.s32 %v2060, 127
        %v2062 = vshll.u32 %v2061, 23
        %v2063 = vor.u32 4788187, %v2062
        %v2064 = vand.u32 2147483647, %v2063
        %v2066 = vcvt.s32.f32 %v2059
        %v2067 = vmul.f32 %v2066, %v2064
        %v2068 = vxor.u32 %v2067, 2147483648
        %v2069 = vsel %vm1948, %v2068, %v2067
        %v2070 = vsub.s32 4, %v2046
        %v2071 = vsel %vm1948, %v2070, %v2046
        %v2072 = vsel %vm1947, %v1783, %v2069
        %v2073 = vsel %vm1947, 0, %v2071
        %v2074 = vmul.f32 %v2072, %v2072
        %v2075 = vmul.f32 %v2074, -0.001358992
        %v2076 = vadd.f32 %v2075, 0.041655596
        %v2077 = vmul.f32 %v2074, %v2076
        %v2078 = vadd.f32 %v2077, -0.4999988
        %v2079 = vmul.f32 %v2074, %v2078
        %v2080 = vadd.f32 1.0, %v2079
        %v2081 = vmul.f32 %v2072, %v2072
        %v2082 = vmul.f32 %v2081, -0.00019511016
        %v2083 = vadd.f32 %v2082, 0.008332121
        %v2084 = vmul.f32 %v2081, %v2083
        %v2085 = vadd.f32 %v2084, -0.16666654
        %v2086 = vmul.f32 %v2081, %v2085
        %v2087 = vadd.f32 %v2086, 1.0
        %v2088 = vmul.f32 %v2087, %v2072
        %vm2089 = vweird.f32 %v1783
        %v2090 = vadd.s32 %v2073, 3
        %v2091 = vand.u32 %v2090, 3
        %vm2092 = vcmp.lt.s32.totalorder %v2091, 2
        %vm2093 = vcmp.eq.s32.totalorder %v2091, 0
        %v2094 = vxor.u32 %v2088, 2147483648
        %v2095 = vsel %vm2093, %v2080, %v2094
        %vm2096 = vcmp.eq.s32.totalorder %v2091, 2
        %v2097 = vxor.u32 %v2080, 2147483648
        %v2098 = vsel %vm2096, %v2097, %v2088
        %v2099 = vsel %vm2092, %v2095, %v2098
        %v2100 = vsel %vm2089, nan, %v2099
        %v2101 = vand.u32 2147483647, %v1786
        %vm2102 = vcmp.le.f32.partialorder %v2101, 0.7853982
        %vm2103 = vcmp.lt.s32.totalorder %v1786, 0
        %v2104 = vand.u32 %v1786, 2139095040
        %v2105 = vshrl.u32 %v2104, 23
        %v2106 = vsub.s32 %v2105, 127
        %v2107 = vand.u32 2147483647, %v1786
        %v2108 = vand.u32 %v2107, 8388607
        %v2109 = vor.u32 %v2108, 8388608
        %v2110 = vsub.s32 0, %v2109
        %v2111 = vadd.s32 %v2106, 1
        %vm2112 = vcmp.gt.s32.totalorder %v2111, 0
        %v2113 = vsel %vm2112, %v2111, 0
        %v2114 = vshrl.u32 %v2113, 5
        %v2115 = vand.u32 %v2113, 31
        %v2116 = vsub.s32 32, %v2115
        %v2117 = vshrl.u32 683565275, %v2116
        %v2118 = vshll.u32 683565275, %v2115
        %v2119 = vshrl.u32 2475754826, %v2116
        %v2120 = vor.u32 %v2118, %v2119
        %v2121 = vshll.u32 2475754826, %v2115
        %v2122 = vshrl.u32 2131351028, %v2116
        %v2123 = vor.u32 %v2121, %v2122
        %v2124 = vshll.u32 2131351028, %v2115
        %v2125 = vshrl.u32 2102212464, %v2116
        %v2126 = vor.u32 %v2124, %v2125
        %v2127 = vshll.u32 2102212464, %v2115
        %v2128 = vshrl.u32 920167782, %v2116
        %v2129 = vor.u32 %v2127, %v2128
        %v2130 = vshll.u32 920167782, %v2115
        %v2131 = vshrl.u32 1326507024, %v2116
        %v2132 = vor.u32 %v2130, %v2131
        %vm2133 = vcmp.lt.s32.totalorder %v2114, 1
        %vm2134 = vcmp.lt.s32.totalorder %v2114, 2
        %vm2135 = vcmp.lt.s32.totalorder %v2114, 3
        %vm2136 = vcmp.lt.s32.totalorder %v2114, 4
        %v2137 = vsel %vm2133, %v2117, %v2120
        %v2138 = vsel %vm2136, %v2126, 2102212464
        %v2139 = vsel %vm2135, %v2123, %v2138
        %v2140 = vsel %vm2134, %v2137, %v2139
        %v2141 = vsel %vm2133, %v2120, %v2123
        %v2142 = vsel %vm2136, %v2129, 920167782
        %v2143 = vsel %vm2135, %v2126, %v2142
        %v2144 = vsel %vm2134, %v2141, %v2143
        %v2145 = vsel %vm2133, %v2123, %v2126
        %v2146 = vsel %vm2136, %v2132, 1326507024
        %v2147 = vsel %vm2135, %v2129, %v2146
        %v2148 = vsel %vm2134, %v2145, %v2147
        %v2149 = vshll.u32 %v2109, 8
        %v2150 = vand.u32 %v2149, 65535
        %v2151 = vshrl.u32 %v2149, 16
        %v2152 = vand.u32 %v2148, 65535
        %v2153 = vshrl.u32 %v2148, 16
        %v2154 = vmul.u32 %v2150, %v2152
        %v2155 = vmul.u32 %v2150, %v2153
        %v2156 = vmul.u32 %v2151, %v2152
        %v2157 = vmul.u32 %v2151, %v2153
        %v2158 = vshll.u32 %v2155, 16
        %v2159 = vshrl.u32 %v2155, 16
        %v2160 = vshll.u32 %v2156, 16
        %v2161 = vshrl.u32 %v2156, 16
        %vm2162 = vc.u32 %v2154, %v2158
        %v2163 = vsel %vm2162, 1, 0
        %v2164 = vadd.s32 %v2154, %v2158
        %v2165 = vadd.s32 %v2157, %v2163
        %vm2166 = vc.u32 %v2164, %v2160
        %v2167 = vsel %vm2166, 1, 0
        %v2168 = vadd.s32 %v2164, %v2160
        %v2169 = vadd.s32 %v2165, %v2167
        %v2170 = vadd.s32 %v2169, %v2159
        %v2171 = vadd.s32 %v2170, %v2161
        %v2172 = vand.u32 %v2149, 65535
        %v2173 = vshrl.u32 %v2149, 16
        %v2174 = vand.u32 %v2144, 65535
        %v2175 = vshrl.u32 %v2144, 16
        %v2176 = vmul.u32 %v2172, %v2174
        %v2177 = vmul.u32 %v2172, %v2175
        %v2178 = vmul.u32 %v2173, %v2174
        %v2179 = vmul.u32 %v2173, %v2175
        %v2180 = vshll.u32 %v2177, 16
        %v2181 = vshrl.u32 %v2177, 16
        %v2182 = vshll.u32 %v2178, 16
        %v2183 = vshrl.u32 %v2178, 16
        %vm2184 = vc.u32 %v2176, %v2180
        %v2185 = vsel %vm2184, 1, 0
        %v2186 = vadd.s32 %v2176, %v2180
        %v2187 = vadd.s32 %v2179, %v2185
        %vm2188 = vc.u32 %v2186, %v2182
        %v2189 = vsel %vm2188, 1, 0
        %v2190 = vadd.s32 %v2186, %v2182
        %v2191 = vadd.s32 %v2187, %v2189
        %v2192 = vadd.s32 %v2191, %v2181
        %v2193 = vadd.s32 %v2192, %v2183
        %v2194 = vmul.u32 %v2149, %v2140
        %v2195 = vadd.s32 %v2171, %v2190
        %vm2196 = vc.u32 %v2171, %v2190
        %v2197 = vadd.s32 %v2193, 1
        %v2198 = vsel %vm2196, %v2197, %v2193
        %v2199 = vadd.s32 %v2194, %v2198
        %v2200 = vadd.s32 %v2199, 536870912
        %v2201 = vshrl.u32 %v2200, 30
        %v2202 = vshll.u32 %v2201, 30
        %v2203 = vsub.s32 %v2199, %v2202
        %vm2204 = vcmp.lt.s32.totalorder %v2203, 0
        %v2205 = vsub.s32 0, %v2203
        %v2206 = vsel %vm2204, %v2205, %v2203
        %v2207 = vclz %v2206
        %v2208 = vsub.s32 %v2207, 2
        %vm2209 = vcmp.gt.s32.totalorder 0, %v2208
        %v2210 = vsel %vm2209, 0, %v2208
        %v2211 = vsub.s32 32, %v2210
        %v2212 = vshll.u32 %v2203, %v2210
        %v2213 = vshrl.u32 %v2195, %v2211
        %v2214 = vor.u32 %v2212, %v2213
        %v2215 = vsub.s32 4294967266, %v2210
        %v2216 = vadd.s32 %v2215, 127
        %v2217 = vshll.u32 %v2216, 23
        %v2218 = vor.u32 4788187, %v2217
        %v2219 = vand.u32 2147483647, %v2218
        %v2221 = vcvt.s32.f32 %v2214
        %v2222 = vmul.f32 %v2221, %v2219
        %v2223 = vxor.u32 %v2222, 2147483648
        %v2224 = vsel %vm2103, %v2223, %v2222
        %v2225 = vsub.s32 4, %v2201
        %v2226 = vsel %vm2103, %v2225, %v2201
        %v2227 = vsel %vm2102, %v1786, %v2224
        %v2228 = vsel %vm2102, 0, %v2226
        %v2229 = vmul.f32 %v2227, %v2227
        %v2230 = vmul.f32 %v2229, -0.001358992
        %v2231 = vadd.f32 %v2230, 0.041655596
        %v2232 = vmul.f32 %v2229, %v2231
        %v2233 = vadd.f32 %v2232, -0.4999988
        %v2234 = vmul.f32 %v2229, %v2233
        %v2235 = vadd.f32 1.0, %v2234
        %v2236 = vmul.f32 %v2227, %v2227
        %v2237 = vmul.f32 %v2236, -0.00019511016
        %v2238 = vadd.f32 %v2237, 0.008332121
        %v2239 = vmul.f32 %v2236, %v2238
        %v2240 = vadd.f32 %v2239, -0.16666654
        %v2241 = vmul.f32 %v2236, %v2240
        %v2242 = vadd.f32 %v2241, 1.0
        %v2243 = vmul.f32 %v2242, %v2227
        %vm2244 = vweird.f32 %v1786
        %v2245 = vadd.s32 %v2228, 3
        %v2246 = vand.u32 %v2245, 3
        %vm2247 = vcmp.lt.s32.totalorder %v2246, 2
        %vm2248 = vcmp.eq.s32.totalorder %v2246, 0
        %v2249 = vxor.u32 %v2243, 2147483648
        %v2250 = vsel %vm2248, %v2235, %v2249
        %vm2251 = vcmp.eq.s32.totalorder %v2246, 2
        %v2252 = vxor.u32 %v2235, 2147483648
        %v2253 = vsel %vm2251, %v2252, %v2243
        %v2254 = vsel %vm2247, %v2250, %v2253
        %v2255 = vsel %vm2244, nan, %v2254
        %v2256 = vand.u32 2147483647, %v1789
        %vm2257 = vcmp.le.f32.partialorder %v2256, 0.7853982
        %vm2258 = vcmp.lt.s32.totalorder %v1789, 0
        %v2259 = vand.u32 %v1789, 2139095040
        %v2260 = vshrl.u32 %v2259, 23
        %v2261 = vsub.s32 %v2260, 127
        %v2262 = vand.u32 2147483647, %v1789
        %v2263 = vand.u32 %v2262, 8388607
        %v2264 = vor.u32 %v2263, 8388608
        %v2265 = vsub.s32 0, %v2264
        %v2266 = vadd.s32 %v2261, 1
        %vm2267 = vcmp.gt.s32.totalorder %v2266, 0
        %v2268 = vsel %vm2267, %v2266, 0
        %v2269 = vshrl.u32 %v2268, 5
        %v2270 = vand.u32 %v2268, 31
        %v2271 = vsub.s32 32, %v2270
        %v2272 = vshrl.u32 683565275, %v2271
        %v2273 = vshll.u32 683565275, %v2270
        %v2274 = vshrl.u32 2475754826, %v2271
        %v2275 = vor.u32 %v2273, %v2274
        %v2276 = vshll.u32 2475754826, %v2270
        %v2277 = vshrl.u32 2131351028, %v2271
        %v2278 = vor.u32 %v2276, %v2277
        %v2279 = vshll.u32 2131351028, %v2270
        %v2280 = vshrl.u32 2102212464, %v2271
        %v2281 = vor.u32 %v2279, %v2280
        %v2282 = vshll.u32 2102212464, %v2270
        %v2283 = vshrl.u32 920167782, %v2271
        %v2284 = vor.u32 %v2282, %v2283
        %v2285 = vshll.u32 920167782, %v2270
        %v2286 = vshrl.u32 1326507024, %v2271
        %v2287 = vor.u32 %v2285, %v2286
        %vm2288 = vcmp.lt.s32.totalorder %v2269, 1
        %vm2289 = vcmp.lt.s32.totalorder %v2269, 2
        %vm2290 = vcmp.lt.s32.totalorder %v2269, 3
        %vm2291 = vcmp.lt.s32.totalorder %v2269, 4
        %v2292 = vsel %vm2288, %v2272, %v2275
        %v2293 = vsel %vm2291, %v2281, 2102212464
        %v2294 = vsel %vm2290, %v2278, %v2293
        %v2295 = vsel %vm2289, %v2292, %v2294
        %v2296 = vsel %vm2288, %v2275, %v2278
        %v2297 = vsel %vm2291, %v2284, 920167782
        %v2298 = vsel %vm2290, %v2281, %v2297
        %v2299 = vsel %vm2289, %v2296, %v2298
        %v2300 = vsel %vm2288, %v2278, %v2281
        %v2301 = vsel %vm2291, %v2287, 1326507024
        %v2302 = vsel %vm2290, %v2284, %v2301
        %v2303 = vsel %vm2289, %v2300, %v2302
        %v2304 = vshll.u32 %v2264, 8
        %v2305 = vand.u32 %v2304, 65535
        %v2306 = vshrl.u32 %v2304, 16
        %v2307 = vand.u32 %v2303, 65535
        %v2308 = vshrl.u32 %v2303, 16
        %v2309 = vmul.u32 %v2305, %v2307
        %v2310 = vmul.u32 %v2305, %v2308
        %v2311 = vmul.u32 %v2306, %v2307
        %v2312 = vmul.u32 %v2306, %v2308
        %v2313 = vshll.u32 %v2310, 16
        %v2314 = vshrl.u32 %v2310, 16
        %v2315 = vshll.u32 %v2311, 16
        %v2316 = vshrl.u32 %v2311, 16
        %vm2317 = vc.u32 %v2309, %v2313
        %v2318 = vsel %vm2317, 1, 0
        %v2319 = vadd.s32 %v2309, %v2313
        %v2320 = vadd.s32 %v2312, %v2318
        %vm2321 = vc.u32 %v2319, %v2315
        %v2322 = vsel %vm2321, 1, 0
        %v2323 = vadd.s32 %v2319, %v2315
        %v2324 = vadd.s32 %v2320, %v2322
        %v2325 = vadd.s32 %v2324, %v2314
        %v2326 = vadd.s32 %v2325, %v2316
        %v2327 = vand.u32 %v2304, 65535
        %v2328 = vshrl.u32 %v2304, 16
        %v2329 = vand.u32 %v2299, 65535
        %v2330 = vshrl.u32 %v2299, 16
        %v2331 = vmul.u32 %v2327, %v2329
        %v2332 = vmul.u32 %v2327, %v2330
        %v2333 = vmul.u32 %v2328, %v2329
        %v2334 = vmul.u32 %v2328, %v2330
        %v2335 = vshll.u32 %v2332, 16
        %v2336 = vshrl.u32 %v2332, 16
        %v2337 = vshll.u32 %v2333, 16
        %v2338 = vshrl.u32 %v2333, 16
        %vm2339 = vc.u32 %v2331, %v2335
        %v2340 = vsel %vm2339, 1, 0
        %v2341 = vadd.s32 %v2331, %v2335
        %v2342 = vadd.s32 %v2334, %v2340
        %vm2343 = vc.u32 %v2341, %v2337
        %v2344 = vsel %vm2343, 1, 0
        %v2345 = vadd.s32 %v2341, %v2337
        %v2346 = vadd.s32 %v2342, %v2344
        %v2347 = vadd.s32 %v2346, %v2336
        %v2348 = vadd.s32 %v2347, %v2338
        %v2349 = vmul.u32 %v2304, %v2295
        %v2350 = vadd.s32 %v2326, %v2345
        %vm2351 = vc.u32 %v2326, %v2345
        %v2352 = vadd.s32 %v2348, 1
        %v2353 = vsel %vm2351, %v2352, %v2348
        %v2354 = vadd.s32 %v2349, %v2353
        %v2355 = vadd.s32 %v2354, 536870912
        %v2356 = vshrl.u32 %v2355, 30
        %v2357 = vshll.u32 %v2356, 30
        %v2358 = vsub.s32 %v2354, %v2357
        %vm2359 = vcmp.lt.s32.totalorder %v2358, 0
        %v2360 = vsub.s32 0, %v2358
        %v2361 = vsel %vm2359, %v2360, %v2358
        %v2362 = vclz %v2361
        %v2363 = vsub.s32 %v2362, 2
        %vm2364 = vcmp.gt.s32.totalorder 0, %v2363
        %v2365 = vsel %vm2364, 0, %v2363
        %v2366 = vsub.s32 32, %v2365
        %v2367 = vshll.u32 %v2358, %v2365
        %v2368 = vshrl.u32 %v2350, %v2366
        %v2369 = vor.u32 %v2367, %v2368
        %v2370 = vsub.s32 4294967266, %v2365
        %v2371 = vadd.s32 %v2370, 127
        %v2372 = vshll.u32 %v2371, 23
        %v2373 = vor.u32 4788187, %v2372
        %v2374 = vand.u32 2147483647, %v2373
        %v2376 = vcvt.s32.f32 %v2369
        %v2377 = vmul.f32 %v2376, %v2374
        %v2378 = vxor.u32 %v2377, 2147483648
        %v2379 = vsel %vm2258, %v2378, %v2377
        %v2380 = vsub.s32 4, %v2356
        %v2381 = vsel %vm2258, %v2380, %v2356
        %v2382 = vsel %vm2257, %v1789, %v2379
        %v2383 = vsel %vm2257, 0, %v2381
        %v2384 = vmul.f32 %v2382, %v2382
        %v2385 = vmul.f32 %v2384, -0.001358992
        %v2386 = vadd.f32 %v2385, 0.041655596
        %v2387 = vmul.f32 %v2384, %v2386
        %v2388 = vadd.f32 %v2387, -0.4999988
        %v2389 = vmul.f32 %v2384, %v2388
        %v2390 = vadd.f32 1.0, %v2389
        %v2391 = vmul.f32 %v2382, %v2382
        %v2392 = vmul.f32 %v2391, -0.00019511016
        %v2393 = vadd.f32 %v2392, 0.008332121
        %v2394 = vmul.f32 %v2391, %v2393
        %v2395 = vadd.f32 %v2394, -0.16666654
        %v2396 = vmul.f32 %v2391, %v2395
        %v2397 = vadd.f32 %v2396, 1.0
        %v2398 = vmul.f32 %v2397, %v2382
        %vm2399 = vweird.f32 %v1789
        %v2400 = vadd.s32 %v2383, 3
        %v2401 = vand.u32 %v2400, 3
        %vm2402 = vcmp.lt.s32.totalorder %v2401, 2
        %vm2403 = vcmp.eq.s32.totalorder %v2401, 0
        %v2404 = vxor.u32 %v2398, 2147483648
        %v2405 = vsel %vm2403, %v2390, %v2404
        %vm2406 = vcmp.eq.s32.totalorder %v2401, 2
        %v2407 = vxor.u32 %v2390, 2147483648
        %v2408 = vsel %vm2406, %v2407, %v2398
        %v2409 = vsel %vm2402, %v2405, %v2408
        %v2410 = vsel %vm2399, nan, %v2409
        %v2411 = vld [vmem:[%s7] sm:$0xff]
        %v2412 = vld [vmem:[%s7 + $0x8] sm:$0xff]
        %v2413 = vld [vmem:[%s7 + $0x10] sm:$0xff]
        %v2414 = vld [vmem:[%s7 + $0x18] sm:$0xff]
        %v2415 = vld [vmem:[#allocation2] sm:$0x1]
        %2417 = vset.pattern.permute.xlu0 0
        %2418 = vperm.xlu0 %2417, %v2411
        %v2419 = vpop.permute.xlu0 %2418
        %2422 = vset.pattern.permute.xlu0 0
        %2423 = vperm.xlu0 %2422, %v2412
        %v2424 = vpop.permute.xlu0 %2423
        %2427 = vset.pattern.permute.xlu0 0
        %2428 = vperm.xlu0 %2427, %v2413
        %v2429 = vpop.permute.xlu0 %2428
        %2432 = vset.pattern.permute.xlu0 0
        %2433 = vperm.xlu0 %2432, %v2414
        %v2434 = vpop.permute.xlu0 %2433
        %v2436 = vmul.f32 %v2419, %v1945
        %v2437 = vmul.f32 %v2424, %v2100
        %v2438 = vmul.f32 %v2429, %v2255
        %v2439 = vmul.f32 %v2434, %v2410
        %v2440 = vadd.f32 %v2436, %v2437
        %v2441 = vadd.f32 %v2440, %v2438
        %v2442 = vadd.f32 %v2441, %v2439
        %v2443 = vrot.slane %v2442, 4
        %v2444 = vadd.f32 %v2442, %v2443
        %v2445 = vrot.slane %v2444, 2
        %v2446 = vadd.f32 %v2444, %v2445
        %v2447 = vrot.slane %v2446, 1
        %v2448 = vadd.f32 %v2446, %v2447
        %2450 = vset.pattern.permute.xlu0 0
        %2451 = vperm.xlu0 %2450, %v2415
        %v2452 = vpop.permute.xlu0 %2451
        %v2454 = vperm.slane %v2452, 0
        %v2455 = vadd.f32 %v2448, %v2454
        %2456 = vst [vmem:[%s324] sm:$0x1] %v2455
        %s2457 = sand.u32 %s227, 1
        %s2458 = scalar_lea.sflag [#allocation4], %s2457
        %s2459 = sand.u32 %s227, 1
        %s2460 = scalar_lea.vmem [#allocation3], %s2459
        // Predicated region
        $region57: #{tpu_custom_call.1} parent=55 // pred_check
          %p2461 = pneg %p237
        $region58: #{tpu_custom_call.1} parent=55 // pred_check_branch
          %2463 = sbr.rel (%p2461) target = $region60
        $region59: #{tpu_custom_call.1} parent=55 // pred_region
          %2465 = vsyncadd %s2458, 0
          %s2466 = scalar_lea.hbm %s9, %s25
          %s2468 = sshll.u32 %s2460, 4
          %s2469 = int_to_ptr.vmem [resolvable:$true] %s2468
          %s2470 = sshll.u32 %s2466, 4
          %s2471 = int_to_ptr.hbm [resolvable:$true] %s2470
          %2473 = dma.vmem_to_hbm [thread:$0]  %s2469, 16, %s2471, %s2458
        $region60: #{tpu_custom_call.1} parent=55 // pred_fallthru
          _
      $region56: #{tpu_custom_call.1} parent=5 // pred_fallthru
        _
      %p2474 = scmp.le.s32.totalorder 2, %s20
      // Predicated region
      $region61: #{tpu_custom_call.1} parent=5 // pred_check
        %p2475 = pneg %p2474
      $region62: #{tpu_custom_call.1} parent=5 // pred_check_branch
        %2477 = sbr.rel (%p2475) target = $region64
      $region63: #{tpu_custom_call.1} parent=5 // pred_region
        %s2478 = ssub.s32 %s20, 2
        // Predicated region
        $region65: #{tpu_custom_call.1} parent=63 // pred_check
          %p2479 = pneg %p243
        $region66: #{tpu_custom_call.1} parent=63 // pred_check_branch
          %2481 = sbr.rel (%p2479) target = $region68
        $region67: #{tpu_custom_call.1} parent=63 // pred_region
          %s2482 = sand.u32 %s228, 1
          %s2483 = scalar_lea.sflag [#allocation4], %s2482
          %s2484 = sand.u32 %s228, 1
          %s2485 = scalar_lea.vmem [#allocation3], %s2484
          %2487 = dma.done %s2483, 16
        $region68: #{tpu_custom_call.1} parent=63 // pred_fallthru
          _
      $region64: #{tpu_custom_call.1} parent=5 // pred_fallthru
        _
    $region6: #{tpu_custom_call.1} parent=1 // loop_footer
      %s24 = sadd.s32 1, %s20
    $region7: #{tpu_custom_call.1} parent=1 // loop_footer_branch
      %19 = sbr.rel target = $region3
    $region8: #{tpu_custom_call.1} parent=1 // loop_exit
      _
    %2488 = vsyncpa [#allocation4], 1
    %s2489 = scalar_lea.sflag [#allocation4], 1
    %2490 = vsyncpa %s2489, 1

</llo_original>
